<compile_context>
chip_gen: v7x
topology: tpu7x:2x2x1
jax: 0.10.0
libtpu: 0.0.40
codegen_flags: <defaults>
</compile_context>

<pallas_src>
import functools

import jax
import jax.numpy as jnp
from jax.experimental import pallas as pl
from jax.experimental.pallas import tpu as pltpu


def _cross_attention_kernel(obj_ref, sub_ref, scn_ref,
                            wq_ref, bq_ref,
                            ws_ref, bs_ref,
                            we_ref, be_ref,
                            ln_ref,
                            out_ref,
                            *, scale, eps, bt, s, skv, c, p):
    obj = obj_ref[...].astype(jnp.float32)    # (Bt, S, C)
    sub = sub_ref[...].astype(jnp.float32)    # (Bt, Skv, C)
    scn = scn_ref[...].astype(jnp.float32)    # (Bt, Skv, C)

    # Fold batch into the M dimension for the projections.
    obj2 = obj.reshape(bt * s, c)
    sub2 = sub.reshape(bt * skv, c)
    scn2 = scn.reshape(bt * skv, c)

    # One matmul per source tensor; K|V packed along the lane (N) dimension.
    q = (jnp.dot(obj2, wq_ref[...], preferred_element_type=jnp.float32)
         + bq_ref[0]).reshape(bt, s, p)                                   # (Bt,S,P)
    kv_s = jnp.dot(sub2, ws_ref[...], preferred_element_type=jnp.float32) + bs_ref[0]
    kv_e = jnp.dot(scn2, we_ref[...], preferred_element_type=jnp.float32) + be_ref[0]
    sk = kv_s[:, :p].reshape(bt, skv, p)
    sv = kv_s[:, p:].reshape(bt, skv, p)
    ek = kv_e[:, :p].reshape(bt, skv, p)
    ev = kv_e[:, p:].reshape(bt, skv, p)

    # Fused score matmul for both attention branches; contraction on the last
    # dims so no explicit transpose of the key tiles is needed.
    k_cat = jnp.concatenate([sk, ek], axis=1)                             # (Bt,2Skv,P)
    scores = jnp.einsum('bqp,bkp->bqk', q, k_cat,
                        preferred_element_type=jnp.float32) * scale       # (Bt,S,2Skv)

    def softmax(a):
        a = a - jnp.max(a, axis=-1, keepdims=True)
        e = jnp.exp(a)
        return e * pl.reciprocal(jnp.sum(e, axis=-1, keepdims=True), approx=True)

    p1 = softmax(scores[:, :, :skv])
    p2 = softmax(scores[:, :, skv:])

    i1 = jnp.einsum('bqk,bkp->bqp', p1, sv, preferred_element_type=jnp.float32)
    i2 = jnp.einsum('bqk,bkp->bqp', p2, ev, preferred_element_type=jnp.float32)

    gamma = ln_ref[0]
    beta = ln_ref[1]

    def layernorm(x):  # over last dim C (requires proj_dim == emb_dim)
        mu = jnp.mean(x, axis=-1, keepdims=True)
        var = jnp.mean((x - mu) * (x - mu), axis=-1, keepdims=True)
        return (x - mu) * jax.lax.rsqrt(var + eps) * gamma + beta

    o1 = layernorm(obj + i1)
    o2 = layernorm(obj + i2)

    # Single lane-dense output slab; split back into (I_1, I_2) in the wrapper.
    out_ref[...] = jnp.concatenate([o1, o2], axis=-1).astype(out_ref.dtype)


def _pick_block_b(B, S):
    """Largest divisor of B that keeps >=2 grid steps and Bt*S <= ~512."""
    if B <= 1:
        return 1
    cap = max(1, 512 // max(S, 1))
    best = 1
    for d in range(1, B // 2 + 1):
        if B % d == 0 and d <= cap:
            best = d
    return best


def cross_attention(obj, sub, scene, params, *, eps=1e-5, block_b=None):
    """obj: [B, S, C]; sub, scene: [B, Skv, C]. Returns (I_1, I_2)."""
    B, S, C = obj.shape
    _, Skv, _ = sub.shape
    P = params["wq"].shape[1]
    # Residual add + LayerNorm over C require proj_dim == emb_dim (as in the model).
    assert P == C, "Cross_Attention requires proj_dim == emb_dim"
    scale = float(P) ** (-0.5)

    Bt = block_b if block_b is not None else _pick_block_b(B, S)
    assert B % Bt == 0, f"block_b={Bt} must divide B={B}"
    grid = (B // Bt,)

    # Pack K/V projection pairs and LayerNorm params in the wrapper (XLA side).
    w_sub = jnp.concatenate([params["wsk"], params["wsv"]], axis=1)   # (C, 2P)
    b_sub = jnp.concatenate([params["bsk"], params["bsv"]], axis=1)   # (1, 2P)
    w_scn = jnp.concatenate([params["wek"], params["wev"]], axis=1)   # (C, 2P)
    b_scn = jnp.concatenate([params["bek"], params["bev"]], axis=1)   # (1, 2P)
    ln = jnp.concatenate([params["ln_gamma"], params["ln_beta"]], axis=0)  # (2, C)

    kernel = functools.partial(_cross_attention_kernel, scale=scale, eps=eps,
                               bt=Bt, s=S, skv=Skv, c=C, p=P)

    def batched(n, width):
        return pl.BlockSpec((Bt, n, width), lambda b: (b, 0, 0))

    def replicated(shape):
        return pl.BlockSpec(shape, lambda b, _s=shape: tuple(0 for _ in _s))

    out = pl.pallas_call(
        kernel,
        out_shape=jax.ShapeDtypeStruct((B, S, 2 * C), obj.dtype),
        grid_spec=pltpu.PrefetchScalarGridSpec(
            num_scalar_prefetch=0,
            grid=grid,
            in_specs=[
                batched(S, C), batched(Skv, C), batched(Skv, C),
                replicated((C, P)), replicated((1, P)),           # q
                replicated((C, 2 * P)), replicated((1, 2 * P)),   # sub k|v
                replicated((C, 2 * P)), replicated((1, 2 * P)),   # scene k|v
                replicated((2, C)),                               # ln gamma|beta
            ],
            out_specs=batched(S, 2 * C),
        ),
        compiler_params=pltpu.CompilerParams(
            dimension_semantics=("parallel",)),
    )(obj, sub, scene,
      params["wq"], params["bq"], w_sub, b_sub, w_scn, b_scn, ln)

    return out[..., :C], out[..., C:]


def _reference(obj, sub, scene, params, eps=1e-5):
    P = params["wq"].shape[1]
    scale = float(P) ** (-0.5)

    def lin(x, w, b):
        return jnp.einsum("bnc,cp->bnp", x, w) + b

    def ln(x):
        mu = jnp.mean(x, axis=-1, keepdims=True)
        var = jnp.mean((x - mu) ** 2, axis=-1, keepdims=True)
        return (x - mu) / jnp.sqrt(var + eps) * params["ln_gamma"][0] + params["ln_beta"][0]

    q = lin(obj, params["wq"], params["bq"])
    sk = lin(sub, params["wsk"], params["bsk"])
    sv = lin(sub, params["wsv"], params["bsv"])
    ek = lin(scene, params["wek"], params["bek"])
    ev = lin(scene, params["wev"], params["bev"])

    a1 = jax.nn.softmax(jnp.einsum("bnp,bmp->bnm", q, sk) * scale, axis=-1)
    a2 = jax.nn.softmax(jnp.einsum("bnp,bmp->bnm", q, ek) * scale, axis=-1)
    i1 = ln(obj + jnp.einsum("bnm,bmp->bnp", a1, sv))
    i2 = ln(obj + jnp.einsum("bnm,bmp->bnp", a2, ev))
    return i1, i2


def _make_params(key, C, P):
    keys = jax.random.split(key, 10)

    def make_linear(kw, kb):
        bound = 1.0 / (C ** 0.5)
        w = jax.random.uniform(kw, (C, P), jnp.float32, -bound, bound)  # [in, out]
        b = jax.random.uniform(kb, (1, P), jnp.float32, -bound, bound)
        return w, b

    wq, bq = make_linear(keys[0], keys[1])
    wsk, bsk = make_linear(keys[2], keys[3])
    wsv, bsv = make_linear(keys[4], keys[5])
    wek, bek = make_linear(keys[6], keys[7])
    wev, bev = make_linear(keys[8], keys[9])
    return dict(
        wq=wq, bq=bq, wsk=wsk, bsk=bsk, wsv=wsv, bsv=bsv,
        wek=wek, bek=bek, wev=wev, bev=bev,
        ln_gamma=jnp.ones((1, C), jnp.float32),
        ln_beta=jnp.zeros((1, C), jnp.float32),
    )


if __name__ == "__main__":
    # Shapes consistent with the module: emb_dim == proj_dim == 32,
    # obj seq = N_p + HW = 8 + 8 = 16, sub/scene seq = HW = 8.
    C = P = 32
    S_obj, S_kv = 16, 8

    key = jax.random.PRNGKey(0)
    kp, k0, k1, k2, k3, k4, k5 = jax.random.split(key, 7)
    params = _make_params(kp, C, P)

    # Case 1: B=2 -> Bt=1, grid=(2,)  (>=2 parallel steps).
    obj = jax.random.normal(k0, (2, S_obj, C), dtype=jnp.float32)
    sub = jax.random.normal(k1, (2, S_kv, C), dtype=jnp.float32)
    scene = jax.random.normal(k2, (2, S_kv, C), dtype=jnp.float32)
    i1, i2 = cross_attention(obj, sub, scene, params)
    jax.block_until_ready((i1, i2))
    r1, r2 = _reference(obj, sub, scene, params)
    assert jnp.allclose(i1, r1, atol=2e-3, rtol=2e-3)
    assert jnp.allclose(i2, r2, atol=2e-3, rtol=2e-3)

    # Case 2: B=4 -> Bt=2, grid=(2,)  (exercises the batched-block path).
    obj4 = jax.random.normal(k3, (4, S_obj, C), dtype=jnp.float32)
    sub4 = jax.random.normal(k4, (4, S_kv, C), dtype=jnp.float32)
    scene4 = jax.random.normal(k5, (4, S_kv, C), dtype=jnp.float32)
    j1, j2 = cross_attention(obj4, sub4, scene4, params)
    jax.block_until_ready((j1, j2))
    s1, s2 = _reference(obj4, sub4, scene4, params)
    assert jnp.allclose(j1, s1, atol=2e-3, rtol=2e-3)
    assert jnp.allclose(j2, s2, atol=2e-3, rtol=2e-3)

    print("KERNEL_OK")
</pallas_src>

<mosaic_0001>
module attributes {stable_mosaic.version = 11 : i64} {
  func.func @_cross_attention_kernel(%arg0: i32, %arg1: memref<1x16x32xf32, #tpu.memory_space<vmem>>, %arg2: memref<1x8x32xf32, #tpu.memory_space<vmem>>, %arg3: memref<1x8x32xf32, #tpu.memory_space<vmem>>, %arg4: memref<32x32xf32, #tpu.memory_space<vmem>>, %arg5: memref<1x32xf32, #tpu.memory_space<vmem>>, %arg6: memref<32x64xf32, #tpu.memory_space<vmem>>, %arg7: memref<1x64xf32, #tpu.memory_space<vmem>>, %arg8: memref<32x64xf32, #tpu.memory_space<vmem>>, %arg9: memref<1x64xf32, #tpu.memory_space<vmem>>, %arg10: memref<2x32xf32, #tpu.memory_space<vmem>>, %arg11: memref<1x16x64xf32, #tpu.memory_space<vmem>>) attributes {dimension_semantics = [#tpu.dimension_semantics<parallel>], iteration_bounds = array<i64: 2>, scalar_prefetch = 0 : i64, scratch_operands = 0 : i64, tpu.core_type = #tpu.core_type<tc>, window_params = [{transform_indices = @transform_0, window_bounds = array<i64: 1, 16, 32>}, {transform_indices = @transform_1, window_bounds = array<i64: 1, 8, 32>}, {transform_indices = @transform_2, window_bounds = array<i64: 1, 8, 32>}, {pipeline_mode = #tpu.pipeline_mode<synchronous>, transform_indices = @transform_3, window_bounds = array<i64: 32, 32>}, {pipeline_mode = #tpu.pipeline_mode<synchronous>, transform_indices = @transform_4, window_bounds = array<i64: 1, 32>}, {pipeline_mode = #tpu.pipeline_mode<synchronous>, transform_indices = @transform_5, window_bounds = array<i64: 32, 64>}, {pipeline_mode = #tpu.pipeline_mode<synchronous>, transform_indices = @transform_6, window_bounds = array<i64: 1, 64>}, {pipeline_mode = #tpu.pipeline_mode<synchronous>, transform_indices = @transform_7, window_bounds = array<i64: 32, 64>}, {pipeline_mode = #tpu.pipeline_mode<synchronous>, transform_indices = @transform_8, window_bounds = array<i64: 1, 64>}, {pipeline_mode = #tpu.pipeline_mode<synchronous>, transform_indices = @transform_9, window_bounds = array<i64: 2, 32>}, {transform_indices = @transform_10, window_bounds = array<i64: 1, 16, 64>}]} {
    %c0 = arith.constant 0 : index
    %c0_0 = arith.constant 0 : index
    %c0_1 = arith.constant 0 : index
    %0 = vector.load %arg1[%c0, %c0_0, %c0_1] : memref<1x16x32xf32, #tpu.memory_space<vmem>>, vector<1x16x32xf32>
    %c0_2 = arith.constant 0 : index
    %c0_3 = arith.constant 0 : index
    %c0_4 = arith.constant 0 : index
    %1 = vector.load %arg2[%c0_2, %c0_3, %c0_4] : memref<1x8x32xf32, #tpu.memory_space<vmem>>, vector<1x8x32xf32>
    %c0_5 = arith.constant 0 : index
    %c0_6 = arith.constant 0 : index
    %c0_7 = arith.constant 0 : index
    %2 = vector.load %arg3[%c0_5, %c0_6, %c0_7] : memref<1x8x32xf32, #tpu.memory_space<vmem>>, vector<1x8x32xf32>
    %3 = vector.shape_cast %0 : vector<1x16x32xf32> to vector<16x32xf32>
    %4 = vector.shape_cast %1 : vector<1x8x32xf32> to vector<8x32xf32>
    %5 = vector.shape_cast %2 : vector<1x8x32xf32> to vector<8x32xf32>
    %c0_8 = arith.constant 0 : index
    %c0_9 = arith.constant 0 : index
    %6 = vector.load %arg4[%c0_8, %c0_9] : memref<32x32xf32, #tpu.memory_space<vmem>>, vector<32x32xf32>
    %cst = arith.constant dense<0.000000e+00> : vector<16x32xf32>
    %7 = tpu.matmul %3, %6, %cst {dimension_numbers = #tpu.dot_dimension_numbers<[1], [0], [0], [1], [0, 0, 1, 1], [], []>} : vector<16x32xf32>, vector<32x32xf32>, vector<16x32xf32> -> vector<16x32xf32>
    %c0_10 = arith.constant 0 : index
    %c0_11 = arith.constant 0 : index
    %8 = vector.load %arg5[%c0_10, %c0_11] : memref<1x32xf32, #tpu.memory_space<vmem>>, vector<1x32xf32>
    %9 = vector.shape_cast %8 : vector<1x32xf32> to vector<32xf32>
    %10 = vector.shape_cast %9 : vector<32xf32> to vector<1x32xf32>
    %11 = vector.broadcast %10 : vector<1x32xf32> to vector<16x32xf32>
    %12 = arith.addf %7, %11 : vector<16x32xf32>
    %13 = vector.shape_cast %12 : vector<16x32xf32> to vector<1x16x32xf32>
    %c0_12 = arith.constant 0 : index
    %c0_13 = arith.constant 0 : index
    %14 = vector.load %arg6[%c0_12, %c0_13] : memref<32x64xf32, #tpu.memory_space<vmem>>, vector<32x64xf32>
    %cst_14 = arith.constant dense<0.000000e+00> : vector<8x64xf32>
    %15 = tpu.matmul %4, %14, %cst_14 {dimension_numbers = #tpu.dot_dimension_numbers<[1], [0], [0], [1], [0, 0, 1, 1], [], []>} : vector<8x32xf32>, vector<32x64xf32>, vector<8x64xf32> -> vector<8x64xf32>
    %c0_15 = arith.constant 0 : index
    %c0_16 = arith.constant 0 : index
    %16 = vector.load %arg7[%c0_15, %c0_16] : memref<1x64xf32, #tpu.memory_space<vmem>>, vector<1x64xf32>
    %17 = vector.shape_cast %16 : vector<1x64xf32> to vector<64xf32>
    %18 = vector.shape_cast %17 : vector<64xf32> to vector<1x64xf32>
    %19 = vector.broadcast %18 : vector<1x64xf32> to vector<8x64xf32>
    %20 = arith.addf %15, %19 : vector<8x64xf32>
    %c0_17 = arith.constant 0 : index
    %c0_18 = arith.constant 0 : index
    %21 = vector.load %arg8[%c0_17, %c0_18] : memref<32x64xf32, #tpu.memory_space<vmem>>, vector<32x64xf32>
    %cst_19 = arith.constant dense<0.000000e+00> : vector<8x64xf32>
    %22 = tpu.matmul %5, %21, %cst_19 {dimension_numbers = #tpu.dot_dimension_numbers<[1], [0], [0], [1], [0, 0, 1, 1], [], []>} : vector<8x32xf32>, vector<32x64xf32>, vector<8x64xf32> -> vector<8x64xf32>
    %c0_20 = arith.constant 0 : index
    %c0_21 = arith.constant 0 : index
    %23 = vector.load %arg9[%c0_20, %c0_21] : memref<1x64xf32, #tpu.memory_space<vmem>>, vector<1x64xf32>
    %24 = vector.shape_cast %23 : vector<1x64xf32> to vector<64xf32>
    %25 = vector.shape_cast %24 : vector<64xf32> to vector<1x64xf32>
    %26 = vector.broadcast %25 : vector<1x64xf32> to vector<8x64xf32>
    %27 = arith.addf %22, %26 : vector<8x64xf32>
    %28 = vector.extract_strided_slice %20 {offsets = [0, 0], sizes = [8, 32], strides = [1, 1]} : vector<8x64xf32> to vector<8x32xf32>
    %29 = vector.shape_cast %28 : vector<8x32xf32> to vector<1x8x32xf32>
    %30 = vector.extract_strided_slice %20 {offsets = [0, 32], sizes = [8, 32], strides = [1, 1]} : vector<8x64xf32> to vector<8x32xf32>
    %31 = vector.shape_cast %30 : vector<8x32xf32> to vector<1x8x32xf32>
    %32 = vector.extract_strided_slice %27 {offsets = [0, 0], sizes = [8, 32], strides = [1, 1]} : vector<8x64xf32> to vector<8x32xf32>
    %33 = vector.shape_cast %32 : vector<8x32xf32> to vector<1x8x32xf32>
    %34 = vector.extract_strided_slice %27 {offsets = [0, 32], sizes = [8, 32], strides = [1, 1]} : vector<8x64xf32> to vector<8x32xf32>
    %35 = vector.shape_cast %34 : vector<8x32xf32> to vector<1x8x32xf32>
    %36 = tpu.concatenate %29, %33 in 1 : vector<1x8x32xf32>, vector<1x8x32xf32> -> vector<1x16x32xf32>
    "tpu.trace_start"() <{level = 10 : i32, message = "bqp,bkp->bqk"}> : () -> ()
    %cst_22 = arith.constant dense<0.000000e+00> : vector<1x16x16xf32>
    %37 = tpu.matmul %13, %36, %cst_22 {dimension_numbers = #tpu.dot_dimension_numbers<[2], [2], [1], [1], [0, 0, 0, 1, 1, 1], [0], [0]>} : vector<1x16x32xf32>, vector<1x16x32xf32>, vector<1x16x16xf32> -> vector<1x16x16xf32>
    "tpu.trace_stop"() : () -> ()
    %cst_23 = arith.constant 0.176776692 : f32
    %38 = vector.broadcast %cst_23 : f32 to vector<1x16x16xf32>
    %39 = arith.mulf %37, %38 : vector<1x16x16xf32>
    %40 = vector.extract_strided_slice %39 {offsets = [0, 0, 0], sizes = [1, 16, 8], strides = [1, 1, 1]} : vector<1x16x16xf32> to vector<1x16x8xf32>
    %cst_24 = arith.constant dense<0xFF800000> : vector<1x16xf32>
    %41 = vector.multi_reduction <maximumf>, %40, %cst_24 [2] : vector<1x16x8xf32> to vector<1x16xf32>
    %42 = vector.shape_cast %41 : vector<1x16xf32> to vector<1x16x1xf32>
    %43 = vector.broadcast %42 : vector<1x16x1xf32> to vector<1x16x8xf32>
    %44 = arith.subf %40, %43 : vector<1x16x8xf32>
    %45 = math.exp %44 : vector<1x16x8xf32>
    %cst_25 = arith.constant dense<0.000000e+00> : vector<1x16xf32>
    %46 = vector.multi_reduction <add>, %45, %cst_25 [2] : vector<1x16x8xf32> to vector<1x16xf32>
    %47 = vector.shape_cast %46 : vector<1x16xf32> to vector<1x16x1xf32>
    %48 = tpu.reciprocal %47 {approx = true} : vector<1x16x1xf32> -> vector<1x16x1xf32>
    %49 = vector.broadcast %48 : vector<1x16x1xf32> to vector<1x16x8xf32>
    %50 = arith.mulf %45, %49 : vector<1x16x8xf32>
    %51 = vector.extract_strided_slice %39 {offsets = [0, 0, 8], sizes = [1, 16, 8], strides = [1, 1, 1]} : vector<1x16x16xf32> to vector<1x16x8xf32>
    %cst_26 = arith.constant dense<0xFF800000> : vector<1x16xf32>
    %52 = vector.multi_reduction <maximumf>, %51, %cst_26 [2] : vector<1x16x8xf32> to vector<1x16xf32>
    %53 = vector.shape_cast %52 : vector<1x16xf32> to vector<1x16x1xf32>
    %54 = vector.broadcast %53 : vector<1x16x1xf32> to vector<1x16x8xf32>
    %55 = arith.subf %51, %54 : vector<1x16x8xf32>
    %56 = math.exp %55 : vector<1x16x8xf32>
    %cst_27 = arith.constant dense<0.000000e+00> : vector<1x16xf32>
    %57 = vector.multi_reduction <add>, %56, %cst_27 [2] : vector<1x16x8xf32> to vector<1x16xf32>
    %58 = vector.shape_cast %57 : vector<1x16xf32> to vector<1x16x1xf32>
    %59 = tpu.reciprocal %58 {approx = true} : vector<1x16x1xf32> -> vector<1x16x1xf32>
    %60 = vector.broadcast %59 : vector<1x16x1xf32> to vector<1x16x8xf32>
    %61 = arith.mulf %56, %60 : vector<1x16x8xf32>
    "tpu.trace_start"() <{level = 10 : i32, message = "bqk,bkp->bqp"}> : () -> ()
    %cst_28 = arith.constant dense<0.000000e+00> : vector<1x16x32xf32>
    %62 = tpu.matmul %50, %31, %cst_28 {dimension_numbers = #tpu.dot_dimension_numbers<[2], [1], [1], [2], [0, 0, 0, 1, 1, 2], [0], [0]>} : vector<1x16x8xf32>, vector<1x8x32xf32>, vector<1x16x32xf32> -> vector<1x16x32xf32>
    %cst_29 = arith.constant dense<0.000000e+00> : vector<1x16x32xf32>
    %63 = tpu.matmul %61, %35, %cst_29 {dimension_numbers = #tpu.dot_dimension_numbers<[2], [1], [1], [2], [0, 0, 0, 1, 1, 2], [0], [0]>} : vector<1x16x8xf32>, vector<1x8x32xf32>, vector<1x16x32xf32> -> vector<1x16x32xf32>
    "tpu.trace_stop"() : () -> ()
    %c0_30 = arith.constant 0 : index
    %c0_31 = arith.constant 0 : index
    %64 = vector.load %arg10[%c0_30, %c0_31] : memref<2x32xf32, #tpu.memory_space<vmem>>, vector<1x32xf32>
    %65 = vector.shape_cast %64 : vector<1x32xf32> to vector<32xf32>
    %c1 = arith.constant 1 : index
    %c0_32 = arith.constant 0 : index
    %66 = vector.load %arg10[%c1, %c0_32] : memref<2x32xf32, #tpu.memory_space<vmem>>, vector<1x32xf32>
    %67 = vector.shape_cast %66 : vector<1x32xf32> to vector<32xf32>
    %68 = arith.addf %0, %62 : vector<1x16x32xf32>
    %cst_33 = arith.constant dense<0.000000e+00> : vector<1x16xf32>
    %69 = vector.multi_reduction <add>, %68, %cst_33 [2] : vector<1x16x32xf32> to vector<1x16xf32>
    %70 = vector.shape_cast %69 : vector<1x16xf32> to vector<1x16x1xf32>
    %cst_34 = arith.constant 3.200000e+01 : f32
    %71 = vector.broadcast %cst_34 : f32 to vector<1x16x1xf32>
    %72 = arith.divf %70, %71 : vector<1x16x1xf32>
    %73 = vector.broadcast %72 : vector<1x16x1xf32> to vector<1x16x32xf32>
    %74 = arith.subf %68, %73 : vector<1x16x32xf32>
    %75 = vector.broadcast %72 : vector<1x16x1xf32> to vector<1x16x32xf32>
    %76 = arith.subf %68, %75 : vector<1x16x32xf32>
    %77 = arith.mulf %74, %76 : vector<1x16x32xf32>
    %cst_35 = arith.constant dense<0.000000e+00> : vector<1x16xf32>
    %78 = vector.multi_reduction <add>, %77, %cst_35 [2] : vector<1x16x32xf32> to vector<1x16xf32>
    %79 = vector.shape_cast %78 : vector<1x16xf32> to vector<1x16x1xf32>
    %cst_36 = arith.constant 3.200000e+01 : f32
    %80 = vector.broadcast %cst_36 : f32 to vector<1x16x1xf32>
    %81 = arith.divf %79, %80 : vector<1x16x1xf32>
    %82 = vector.broadcast %72 : vector<1x16x1xf32> to vector<1x16x32xf32>
    %83 = arith.subf %68, %82 : vector<1x16x32xf32>
    %cst_37 = arith.constant 9.99999974E-6 : f32
    %84 = vector.broadcast %cst_37 : f32 to vector<1x16x1xf32>
    %85 = arith.addf %81, %84 : vector<1x16x1xf32>
    %86 = math.rsqrt %85 : vector<1x16x1xf32>
    %87 = vector.broadcast %86 : vector<1x16x1xf32> to vector<1x16x32xf32>
    %88 = arith.mulf %83, %87 : vector<1x16x32xf32>
    %89 = vector.shape_cast %65 : vector<32xf32> to vector<1x1x32xf32>
    %90 = vector.broadcast %89 : vector<1x1x32xf32> to vector<1x16x32xf32>
    %91 = arith.mulf %88, %90 : vector<1x16x32xf32>
    %92 = vector.shape_cast %67 : vector<32xf32> to vector<1x1x32xf32>
    %93 = vector.broadcast %92 : vector<1x1x32xf32> to vector<1x16x32xf32>
    %94 = arith.addf %91, %93 : vector<1x16x32xf32>
    %95 = arith.addf %0, %63 : vector<1x16x32xf32>
    %cst_38 = arith.constant dense<0.000000e+00> : vector<1x16xf32>
    %96 = vector.multi_reduction <add>, %95, %cst_38 [2] : vector<1x16x32xf32> to vector<1x16xf32>
    %97 = vector.shape_cast %96 : vector<1x16xf32> to vector<1x16x1xf32>
    %cst_39 = arith.constant 3.200000e+01 : f32
    %98 = vector.broadcast %cst_39 : f32 to vector<1x16x1xf32>
    %99 = arith.divf %97, %98 : vector<1x16x1xf32>
    %100 = vector.broadcast %99 : vector<1x16x1xf32> to vector<1x16x32xf32>
    %101 = arith.subf %95, %100 : vector<1x16x32xf32>
    %102 = vector.broadcast %99 : vector<1x16x1xf32> to vector<1x16x32xf32>
    %103 = arith.subf %95, %102 : vector<1x16x32xf32>
    %104 = arith.mulf %101, %103 : vector<1x16x32xf32>
    %cst_40 = arith.constant dense<0.000000e+00> : vector<1x16xf32>
    %105 = vector.multi_reduction <add>, %104, %cst_40 [2] : vector<1x16x32xf32> to vector<1x16xf32>
    %106 = vector.shape_cast %105 : vector<1x16xf32> to vector<1x16x1xf32>
    %cst_41 = arith.constant 3.200000e+01 : f32
    %107 = vector.broadcast %cst_41 : f32 to vector<1x16x1xf32>
    %108 = arith.divf %106, %107 : vector<1x16x1xf32>
    %109 = vector.broadcast %99 : vector<1x16x1xf32> to vector<1x16x32xf32>
    %110 = arith.subf %95, %109 : vector<1x16x32xf32>
    %cst_42 = arith.constant 9.99999974E-6 : f32
    %111 = vector.broadcast %cst_42 : f32 to vector<1x16x1xf32>
    %112 = arith.addf %108, %111 : vector<1x16x1xf32>
    %113 = math.rsqrt %112 : vector<1x16x1xf32>
    %114 = vector.broadcast %113 : vector<1x16x1xf32> to vector<1x16x32xf32>
    %115 = arith.mulf %110, %114 : vector<1x16x32xf32>
    %116 = vector.shape_cast %65 : vector<32xf32> to vector<1x1x32xf32>
    %117 = vector.broadcast %116 : vector<1x1x32xf32> to vector<1x16x32xf32>
    %118 = arith.mulf %115, %117 : vector<1x16x32xf32>
    %119 = vector.shape_cast %67 : vector<32xf32> to vector<1x1x32xf32>
    %120 = vector.broadcast %119 : vector<1x1x32xf32> to vector<1x16x32xf32>
    %121 = arith.addf %118, %120 : vector<1x16x32xf32>
    %122 = tpu.concatenate %94, %121 in 2 : vector<1x16x32xf32>, vector<1x16x32xf32> -> vector<1x16x64xf32>
    %c0_43 = arith.constant 0 : index
    %c0_44 = arith.constant 0 : index
    %c0_45 = arith.constant 0 : index
    %123 = vector.load %arg11[%c0_43, %c0_44, %c0_45] : memref<1x16x64xf32, #tpu.memory_space<vmem>>, vector<1x16x64xf32>
    tpu.vector_store %arg11[%c0_43, %c0_44, %c0_45], %122 {strides = array<i32>} : memref<1x16x64xf32, #tpu.memory_space<vmem>>, vector<1x16x64xf32>,
    return
  }
  func.func @transform_0(%arg0: i32) -> (i32, i32, i32) {
    %c0_i32 = arith.constant 0 : i32
    %c0_i32_0 = arith.constant 0 : i32
    %c0_i32_1 = arith.constant 0 : i32
    return %arg0, %c0_i32, %c0_i32_0 : i32, i32, i32
  }
  func.func @transform_1(%arg0: i32) -> (i32, i32, i32) {
    %c0_i32 = arith.constant 0 : i32
    %c0_i32_0 = arith.constant 0 : i32
    %c0_i32_1 = arith.constant 0 : i32
    return %arg0, %c0_i32, %c0_i32_0 : i32, i32, i32
  }
  func.func @transform_2(%arg0: i32) -> (i32, i32, i32) {
    %c0_i32 = arith.constant 0 : i32
    %c0_i32_0 = arith.constant 0 : i32
    %c0_i32_1 = arith.constant 0 : i32
    return %arg0, %c0_i32, %c0_i32_0 : i32, i32, i32
  }
  func.func @transform_3(%arg0: i32) -> (i32, i32) {
    %c0_i32 = arith.constant 0 : i32
    %c0_i32_0 = arith.constant 0 : i32
    %c0_i32_1 = arith.constant 0 : i32
    return %c0_i32, %c0_i32_0 : i32, i32
  }
  func.func @transform_4(%arg0: i32) -> (i32, i32) {
    %c0_i32 = arith.constant 0 : i32
    %c0_i32_0 = arith.constant 0 : i32
    %c0_i32_1 = arith.constant 0 : i32
    return %c0_i32, %c0_i32_0 : i32, i32
  }
  func.func @transform_5(%arg0: i32) -> (i32, i32) {
    %c0_i32 = arith.constant 0 : i32
    %c0_i32_0 = arith.constant 0 : i32
    %c0_i32_1 = arith.constant 0 : i32
    return %c0_i32, %c0_i32_0 : i32, i32
  }
  func.func @transform_6(%arg0: i32) -> (i32, i32) {
    %c0_i32 = arith.constant 0 : i32
    %c0_i32_0 = arith.constant 0 : i32
    %c0_i32_1 = arith.constant 0 : i32
    return %c0_i32, %c0_i32_0 : i32, i32
  }
  func.func @transform_7(%arg0: i32) -> (i32, i32) {
    %c0_i32 = arith.constant 0 : i32
    %c0_i32_0 = arith.constant 0 : i32
    %c0_i32_1 = arith.constant 0 : i32
    return %c0_i32, %c0_i32_0 : i32, i32
  }
  func.func @transform_8(%arg0: i32) -> (i32, i32) {
    %c0_i32 = arith.constant 0 : i32
    %c0_i32_0 = arith.constant 0 : i32
    %c0_i32_1 = arith.constant 0 : i32
    return %c0_i32, %c0_i32_0 : i32, i32
  }
  func.func @transform_9(%arg0: i32) -> (i32, i32) {
    %c0_i32 = arith.constant 0 : i32
    %c0_i32_0 = arith.constant 0 : i32
    %c0_i32_1 = arith.constant 0 : i32
    return %c0_i32, %c0_i32_0 : i32, i32
  }
  func.func @transform_10(%arg0: i32) -> (i32, i32, i32) {
    %c0_i32 = arith.constant 0 : i32
    %c0_i32_0 = arith.constant 0 : i32
    %c0_i32_1 = arith.constant 0 : i32
    return %arg0, %c0_i32, %c0_i32_0 : i32, i32, i32
  }
}

</mosaic_0001>

<llo_original>
// kernel: tpu_custom_call.1
$region0: #{tpu_custom_call.1}
  #allocation0 [shape = 'u32[]', space=smem, size = 0x4, offset = 0x4, fixed_abs, tag = 'smem constant byte address 0x4 - core index']
  #allocation1 [shape = 'u32[144,128]{1,0:T(1,128)}', space=vmem, size = 0x12000, scoped, tag = 'internal scratch']
  %s0 = inlined_call_operand.hbm [shape: f32[2,16,32], index: 0, kind: input, shape index: {}]
  %s1 = inlined_call_operand.hbm [shape: f32[2,8,32], index: 1, kind: input, shape index: {}]
  %s2 = inlined_call_operand.hbm [shape: f32[2,8,32], index: 2, kind: input, shape index: {}]
  %s3 = inlined_call_operand.hbm [shape: f32[32,32], index: 3, kind: input, shape index: {}]
  %s4 = inlined_call_operand.vmem [shape: f32[1,32], index: 4, kind: input, shape index: {}]
  %s5 = inlined_call_operand.hbm [shape: f32[32,64], index: 5, kind: input, shape index: {}]
  %s6 = inlined_call_operand.vmem [shape: f32[1,64], index: 6, kind: input, shape index: {}]
  %s7 = inlined_call_operand.hbm [shape: f32[32,64], index: 7, kind: input, shape index: {}]
  %s8 = inlined_call_operand.vmem [shape: f32[1,64], index: 8, kind: input, shape index: {}]
  %s9 = inlined_call_operand.vmem [shape: f32[2,32], index: 9, kind: input, shape index: {}]
  %s10 = inlined_call_operand.hbm [shape: f32[2,16,64], index: 10, kind: output, shape index: {}]
  %s11 = sld [smem:[#allocation0]]
  $region97: #{tpu_custom_call.1} parent=0
    _
  %s13 = ssub.s32 1, %s11
  %s14 = scalar_select 0, %s13, %s11
  $region1: #{tpu_custom_call.1} parent=0
    #allocation2 [shape = 'u8[16384]{0}', space=vmem, size = 0x4000, scoped, tag = 'input window, operand 0']
    #allocation3 [shape = 's32[2]{0}', space=sflag, size = 0x8, scoped, tag = 'scoped memory for tpu_custom_call.1']
    #allocation4 [shape = 's32[2]{0}', space=sflag, size = 0x8, scoped, tag = 'scoped memory for tpu_custom_call.1']
    #allocation5 [shape = 'u8[8192]{0}', space=vmem, size = 0x2000, scoped, tag = 'input window, operand 1']
    #allocation6 [shape = 's32[2]{0}', space=sflag, size = 0x8, scoped, tag = 'scoped memory for tpu_custom_call.1']
    #allocation7 [shape = 'u8[8192]{0}', space=vmem, size = 0x2000, scoped, tag = 'input window, operand 2']
    #allocation8 [shape = 'u8[16384]{0}', space=vmem, size = 0x4000, scoped, tag = 'input window, operand 3, single buffered']
    #allocation9 [shape = 's32[1]{0}', space=sflag, size = 0x4, scoped, tag = 'scoped memory for tpu_custom_call.1']
    #allocation10 [shape = 'u8[16384]{0}', space=vmem, size = 0x4000, scoped, tag = 'input window, operand 5, single buffered']
    #allocation11 [shape = 'u8[16384]{0}', space=vmem, size = 0x4000, scoped, tag = 'input window, operand 7, single buffered']
    #allocation12 [shape = 's32[1]{0}', space=sflag, size = 0x4, scoped, tag = 'scoped memory for tpu_custom_call.1']
    #allocation13 [shape = 'u8[16384]{0}', space=vmem, size = 0x4000, scoped, tag = 'output window, operand 0']
    %15 = vsyncpa [#allocation3], 0
    %s16 = scalar_lea.sflag [#allocation3], 1
    %17 = vsyncpa %s16, 0
    %18 = vsyncpa [#allocation6], 0
    %s19 = scalar_lea.sflag [#allocation6], 1
    %20 = vsyncpa %s19, 0
    %21 = vsyncpa [#allocation9], 0
    %22 = vsyncpa [#allocation12], 0
    %23 = vsyncpa [#allocation4], 0
    %s24 = scalar_lea.sflag [#allocation4], 1
    %25 = vsyncpa %s24, 0
    loop: start=0, step=1, limit=4
    $region2: #{tpu_custom_call.1} parent=1 // loop_pre_header
      _
    $region3: #{tpu_custom_call.1} parent=1 // loop_header
      %s27 = sphi 0, %s31
      %p28 = scmp.ge.s32.totalorder %s27, 4
      %s37 = sphi 0, %s39
      %s40 = sphi 0, %s37
      %s41 = sphi 0, %s40
      %s57 = sphi 0, %s41
      %s63 = sphi 0, %s65
      %s66 = sphi 0, %s63
      %s67 = sphi 0, %s66
      %s83 = sphi 0, %s67
      %s89 = sphi 0, %s91
      %s92 = sphi 0, %s89
      %s93 = sphi 0, %s92
      %s109 = sphi 0, %s93
      %s113 = sphi 0, %s113
      %s115 = sphi 0, %s113
      %s116 = sphi 0, %s115
      %s130 = sphi 0, %s116
      %s134 = sphi 0, %s134
      %s136 = sphi 0, %s134
      %s137 = sphi 0, %s136
      %s151 = sphi 0, %s137
      %s155 = sphi 0, %s155
      %s157 = sphi 0, %s155
      %s158 = sphi 0, %s157
      %s172 = sphi 0, %s158
      %s176 = sphi 0, %s176
      %s178 = sphi 0, %s176
      %s179 = sphi 0, %s178
      %s193 = sphi 0, %s179
      %s197 = sphi 0, %s197
      %s199 = sphi 0, %s197
      %s200 = sphi 0, %s199
      %s214 = sphi 0, %s200
      %s218 = sphi 0, %s218
      %s220 = sphi 0, %s218
      %s221 = sphi 0, %s220
      %s235 = sphi 0, %s221
      %s239 = sphi 0, %s239
      %s241 = sphi 0, %s239
      %s242 = sphi 0, %s241
      %s256 = sphi 0, %s242
      %s262 = sphi 0, %s264
      %s265 = sphi 0, %s262
      %s266 = sphi 0, %s265
      %s282 = sphi 0, %s266
    $region4: #{tpu_custom_call.1} parent=1 // loop_header_branch
      %30 = sbr.rel (%p28) target = $region8
    $region5: #{tpu_custom_call.1} parent=1 // loop_body
      %s32 = ssub.s32 %s27, 1
      %s33 = ssub.s32 %s27, 2
      %s34 = sadd.s32 %s27, 1
      %s35 = ssub.s32 %s27, %s34
      %p36 = scmp.eq.s32.totalorder %s35, 0
      %s38 = sadd.s32 %s37, 1
      %s39 = scalar_select %p36, %s37, %s38
      %p42 = pneg %p36
      %p43 = scmp.eq.s32.totalorder %s27, 1
      %p44 = por %p42, %p43
      %p45 = scmp.ne.s32.totalorder %s37, %s40
      %p46 = scmp.eq.s32.totalorder %s27, 0
      %p47 = por %p45, %p46
      %p48 = scmp.ne.s32.totalorder %s37, %s40
      %p49 = scmp.eq.s32.totalorder %s32, 1
      %p50 = por %p48, %p49
      %p51 = scmp.ne.s32.totalorder %s40, %s41
      %p52 = scmp.eq.s32.totalorder %s32, 0
      %p53 = por %p51, %p52
      %p54 = scmp.ne.s32.totalorder %s40, %s41
      %p55 = scmp.eq.s32.totalorder %s33, 1
      %p56 = por %p54, %p55
      %p58 = scmp.ne.s32.totalorder %s41, %s57
      %p59 = scmp.eq.s32.totalorder %s33, 0
      %p60 = por %p58, %p59
      %s61 = ssub.s32 %s27, %s34
      %p62 = scmp.eq.s32.totalorder %s61, 0
      %s64 = sadd.s32 %s63, 1
      %s65 = scalar_select %p62, %s63, %s64
      %p68 = pneg %p62
      %p69 = scmp.eq.s32.totalorder %s27, 1
      %p70 = por %p68, %p69
      %p71 = scmp.ne.s32.totalorder %s63, %s66
      %p72 = scmp.eq.s32.totalorder %s27, 0
      %p73 = por %p71, %p72
      %p74 = scmp.ne.s32.totalorder %s63, %s66
      %p75 = scmp.eq.s32.totalorder %s32, 1
      %p76 = por %p74, %p75
      %p77 = scmp.ne.s32.totalorder %s66, %s67
      %p78 = scmp.eq.s32.totalorder %s32, 0
      %p79 = por %p77, %p78
      %p80 = scmp.ne.s32.totalorder %s66, %s67
      %p81 = scmp.eq.s32.totalorder %s33, 1
      %p82 = por %p80, %p81
      %p84 = scmp.ne.s32.totalorder %s67, %s83
      %p85 = scmp.eq.s32.totalorder %s33, 0
      %p86 = por %p84, %p85
      %s87 = ssub.s32 %s27, %s34
      %p88 = scmp.eq.s32.totalorder %s87, 0
      %s90 = sadd.s32 %s89, 1
      %s91 = scalar_select %p88, %s89, %s90
      %p94 = pneg %p88
      %p95 = scmp.eq.s32.totalorder %s27, 1
      %p96 = por %p94, %p95
      %p97 = scmp.ne.s32.totalorder %s89, %s92
      %p98 = scmp.eq.s32.totalorder %s27, 0
      %p99 = por %p97, %p98
      %p100 = scmp.ne.s32.totalorder %s89, %s92
      %p101 = scmp.eq.s32.totalorder %s32, 1
      %p102 = por %p100, %p101
      %p103 = scmp.ne.s32.totalorder %s92, %s93
      %p104 = scmp.eq.s32.totalorder %s32, 0
      %p105 = por %p103, %p104
      %p106 = scmp.ne.s32.totalorder %s92, %s93
      %p107 = scmp.eq.s32.totalorder %s33, 1
      %p108 = por %p106, %p107
      %p110 = scmp.ne.s32.totalorder %s93, %s109
      %p111 = scmp.eq.s32.totalorder %s33, 0
      %p112 = por %p110, %p111
      %s114 = sadd.s32 %s113, 1
      %p117 = scmp.eq.s32.totalorder %s27, 1
      %p118 = scmp.ne.s32.totalorder %s113, %s115
      %p119 = scmp.eq.s32.totalorder %s27, 0
      %p120 = por %p118, %p119
      %p121 = scmp.ne.s32.totalorder %s113, %s115
      %p122 = scmp.eq.s32.totalorder %s32, 1
      %p123 = por %p121, %p122
      %p124 = scmp.ne.s32.totalorder %s115, %s116
      %p125 = scmp.eq.s32.totalorder %s32, 0
      %p126 = por %p124, %p125
      %p127 = scmp.ne.s32.totalorder %s115, %s116
      %p128 = scmp.eq.s32.totalorder %s33, 1
      %p129 = por %p127, %p128
      %p131 = scmp.ne.s32.totalorder %s116, %s130
      %p132 = scmp.eq.s32.totalorder %s33, 0
      %p133 = por %p131, %p132
      %s135 = sadd.s32 %s134, 1
      %p138 = scmp.eq.s32.totalorder %s27, 1
      %p139 = scmp.ne.s32.totalorder %s134, %s136
      %p140 = scmp.eq.s32.totalorder %s27, 0
      %p141 = por %p139, %p140
      %p142 = scmp.ne.s32.totalorder %s134, %s136
      %p143 = scmp.eq.s32.totalorder %s32, 1
      %p144 = por %p142, %p143
      %p145 = scmp.ne.s32.totalorder %s136, %s137
      %p146 = scmp.eq.s32.totalorder %s32, 0
      %p147 = por %p145, %p146
      %p148 = scmp.ne.s32.totalorder %s136, %s137
      %p149 = scmp.eq.s32.totalorder %s33, 1
      %p150 = por %p148, %p149
      %p152 = scmp.ne.s32.totalorder %s137, %s151
      %p153 = scmp.eq.s32.totalorder %s33, 0
      %p154 = por %p152, %p153
      %s156 = sadd.s32 %s155, 1
      %p159 = scmp.eq.s32.totalorder %s27, 1
      %p160 = scmp.ne.s32.totalorder %s155, %s157
      %p161 = scmp.eq.s32.totalorder %s27, 0
      %p162 = por %p160, %p161
      %p163 = scmp.ne.s32.totalorder %s155, %s157
      %p164 = scmp.eq.s32.totalorder %s32, 1
      %p165 = por %p163, %p164
      %p166 = scmp.ne.s32.totalorder %s157, %s158
      %p167 = scmp.eq.s32.totalorder %s32, 0
      %p168 = por %p166, %p167
      %p169 = scmp.ne.s32.totalorder %s157, %s158
      %p170 = scmp.eq.s32.totalorder %s33, 1
      %p171 = por %p169, %p170
      %p173 = scmp.ne.s32.totalorder %s158, %s172
      %p174 = scmp.eq.s32.totalorder %s33, 0
      %p175 = por %p173, %p174
      %s177 = sadd.s32 %s176, 1
      %p180 = scmp.eq.s32.totalorder %s27, 1
      %p181 = scmp.ne.s32.totalorder %s176, %s178
      %p182 = scmp.eq.s32.totalorder %s27, 0
      %p183 = por %p181, %p182
      %p184 = scmp.ne.s32.totalorder %s176, %s178
      %p185 = scmp.eq.s32.totalorder %s32, 1
      %p186 = por %p184, %p185
      %p187 = scmp.ne.s32.totalorder %s178, %s179
      %p188 = scmp.eq.s32.totalorder %s32, 0
      %p189 = por %p187, %p188
      %p190 = scmp.ne.s32.totalorder %s178, %s179
      %p191 = scmp.eq.s32.totalorder %s33, 1
      %p192 = por %p190, %p191
      %p194 = scmp.ne.s32.totalorder %s179, %s193
      %p195 = scmp.eq.s32.totalorder %s33, 0
      %p196 = por %p194, %p195
      %s198 = sadd.s32 %s197, 1
      %p201 = scmp.eq.s32.totalorder %s27, 1
      %p202 = scmp.ne.s32.totalorder %s197, %s199
      %p203 = scmp.eq.s32.totalorder %s27, 0
      %p204 = por %p202, %p203
      %p205 = scmp.ne.s32.totalorder %s197, %s199
      %p206 = scmp.eq.s32.totalorder %s32, 1
      %p207 = por %p205, %p206
      %p208 = scmp.ne.s32.totalorder %s199, %s200
      %p209 = scmp.eq.s32.totalorder %s32, 0
      %p210 = por %p208, %p209
      %p211 = scmp.ne.s32.totalorder %s199, %s200
      %p212 = scmp.eq.s32.totalorder %s33, 1
      %p213 = por %p211, %p212
      %p215 = scmp.ne.s32.totalorder %s200, %s214
      %p216 = scmp.eq.s32.totalorder %s33, 0
      %p217 = por %p215, %p216
      %s219 = sadd.s32 %s218, 1
      %p222 = scmp.eq.s32.totalorder %s27, 1
      %p223 = scmp.ne.s32.totalorder %s218, %s220
      %p224 = scmp.eq.s32.totalorder %s27, 0
      %p225 = por %p223, %p224
      %p226 = scmp.ne.s32.totalorder %s218, %s220
      %p227 = scmp.eq.s32.totalorder %s32, 1
      %p228 = por %p226, %p227
      %p229 = scmp.ne.s32.totalorder %s220, %s221
      %p230 = scmp.eq.s32.totalorder %s32, 0
      %p231 = por %p229, %p230
      %p232 = scmp.ne.s32.totalorder %s220, %s221
      %p233 = scmp.eq.s32.totalorder %s33, 1
      %p234 = por %p232, %p233
      %p236 = scmp.ne.s32.totalorder %s221, %s235
      %p237 = scmp.eq.s32.totalorder %s33, 0
      %p238 = por %p236, %p237
      %s240 = sadd.s32 %s239, 1
      %p243 = scmp.eq.s32.totalorder %s27, 1
      %p244 = scmp.ne.s32.totalorder %s239, %s241
      %p245 = scmp.eq.s32.totalorder %s27, 0
      %p246 = por %p244, %p245
      %p247 = scmp.ne.s32.totalorder %s239, %s241
      %p248 = scmp.eq.s32.totalorder %s32, 1
      %p249 = por %p247, %p248
      %p250 = scmp.ne.s32.totalorder %s241, %s242
      %p251 = scmp.eq.s32.totalorder %s32, 0
      %p252 = por %p250, %p251
      %p253 = scmp.ne.s32.totalorder %s241, %s242
      %p254 = scmp.eq.s32.totalorder %s33, 1
      %p255 = por %p253, %p254
      %p257 = scmp.ne.s32.totalorder %s242, %s256
      %p258 = scmp.eq.s32.totalorder %s33, 0
      %p259 = por %p257, %p258
      %s260 = ssub.s32 %s27, %s34
      %p261 = scmp.eq.s32.totalorder %s260, 0
      %s263 = sadd.s32 %s262, 1
      %s264 = scalar_select %p261, %s262, %s263
      %p267 = pneg %p261
      %p268 = scmp.eq.s32.totalorder %s27, 1
      %p269 = por %p267, %p268
      %p270 = scmp.ne.s32.totalorder %s262, %s265
      %p271 = scmp.eq.s32.totalorder %s27, 0
      %p272 = por %p270, %p271
      %p273 = scmp.ne.s32.totalorder %s262, %s265
      %p274 = scmp.eq.s32.totalorder %s32, 1
      %p275 = por %p273, %p274
      %p276 = scmp.ne.s32.totalorder %s265, %s266
      %p277 = scmp.eq.s32.totalorder %s32, 0
      %p278 = por %p276, %p277
      %p279 = scmp.ne.s32.totalorder %s265, %s266
      %p280 = scmp.eq.s32.totalorder %s33, 1
      %p281 = por %p279, %p280
      %p283 = scmp.ne.s32.totalorder %s266, %s282
      %p284 = scmp.eq.s32.totalorder %s33, 0
      %p285 = por %p283, %p284
      %p286 = scmp.le.s32.totalorder 1, %s27
      %p287 = scmp.lt.s32.totalorder %s27, 3
      %p288 = pnand %p286, %p287
      %p289 = pneg %p288
      // Predicated region
      $region9: #{tpu_custom_call.1} parent=5 // pred_check
        _
      $region10: #{tpu_custom_call.1} parent=5 // pred_check_branch
        %291 = sbr.rel (%p288) target = $region12
      $region11: #{tpu_custom_call.1} parent=5 // pred_region
        %s292 = ssub.s32 %s27, 1
        // Predicated region
        $region13: #{tpu_custom_call.1} parent=11 // pred_check
          %p293 = pneg %p126
        $region14: #{tpu_custom_call.1} parent=11 // pred_check_branch
          %295 = sbr.rel (%p293) target = $region16
        $region15: #{tpu_custom_call.1} parent=11 // pred_region
          %s297 = ssub.s32 512, 512
          %298 = vsyncadd [#allocation9], %s297
          %s299 = sshll.u32 [#allocation8], 4
          %s300 = int_to_ptr.vmem [resolvable:$true] %s299
          %305 = dma.hbm_to_vmem [thread:$0]  %s3, 512, %s300, [#allocation9], 128, 128, 8
        $region16: #{tpu_custom_call.1} parent=11 // pred_fallthru
          _
        // Predicated region
        $region17: #{tpu_custom_call.1} parent=11 // pred_check
          %p306 = pneg %p147
        $region18: #{tpu_custom_call.1} parent=11 // pred_check_branch
          %308 = sbr.rel (%p306) target = $region20
        $region19: #{tpu_custom_call.1} parent=11 // pred_region
          _
        $region20: #{tpu_custom_call.1} parent=11 // pred_fallthru
          _
        // Predicated region
        $region21: #{tpu_custom_call.1} parent=11 // pred_check
          %p309 = pneg %p168
        $region22: #{tpu_custom_call.1} parent=11 // pred_check_branch
          %311 = sbr.rel (%p309) target = $region24
        $region23: #{tpu_custom_call.1} parent=11 // pred_region
          %s313 = ssub.s32 512, 512
          %314 = vsyncadd [#allocation9], %s313
          %s315 = sshll.u32 [#allocation10], 4
          %s316 = int_to_ptr.vmem [resolvable:$true] %s315
          %321 = dma.hbm_to_vmem [thread:$0]  %s5, 512, %s316, [#allocation9], 128, 128, 8
        $region24: #{tpu_custom_call.1} parent=11 // pred_fallthru
          _
        // Predicated region
        $region25: #{tpu_custom_call.1} parent=11 // pred_check
          %p322 = pneg %p189
        $region26: #{tpu_custom_call.1} parent=11 // pred_check_branch
          %324 = sbr.rel (%p322) target = $region28
        $region27: #{tpu_custom_call.1} parent=11 // pred_region
          _
        $region28: #{tpu_custom_call.1} parent=11 // pred_fallthru
          _
        // Predicated region
        $region29: #{tpu_custom_call.1} parent=11 // pred_check
          %p325 = pneg %p210
        $region30: #{tpu_custom_call.1} parent=11 // pred_check_branch
          %327 = sbr.rel (%p325) target = $region32
        $region31: #{tpu_custom_call.1} parent=11 // pred_region
          %s329 = ssub.s32 512, 512
          %330 = vsyncadd [#allocation12], %s329
          %s331 = sshll.u32 [#allocation11], 4
          %s332 = int_to_ptr.vmem [resolvable:$true] %s331
          %337 = dma.hbm_to_vmem [thread:$0]  %s7, 512, %s332, [#allocation12], 128, 128, 8
        $region32: #{tpu_custom_call.1} parent=11 // pred_fallthru
          _
        // Predicated region
        $region33: #{tpu_custom_call.1} parent=11 // pred_check
          %p338 = pneg %p231
        $region34: #{tpu_custom_call.1} parent=11 // pred_check_branch
          %340 = sbr.rel (%p338) target = $region36
        $region35: #{tpu_custom_call.1} parent=11 // pred_region
          _
        $region36: #{tpu_custom_call.1} parent=11 // pred_fallthru
          _
        // Predicated region
        $region37: #{tpu_custom_call.1} parent=11 // pred_check
          %p341 = pneg %p252
        $region38: #{tpu_custom_call.1} parent=11 // pred_check_branch
          %343 = sbr.rel (%p341) target = $region40
        $region39: #{tpu_custom_call.1} parent=11 // pred_region
          _
        $region40: #{tpu_custom_call.1} parent=11 // pred_fallthru
          _
      $region12: #{tpu_custom_call.1} parent=5 // pred_fallthru
        _
      %p344 = scmp.lt.s32.totalorder %s27, 2
      // Predicated region
      $region41: #{tpu_custom_call.1} parent=5 // pred_check
        %p345 = pneg %p344
      $region42: #{tpu_custom_call.1} parent=5 // pred_check_branch
        %347 = sbr.rel (%p345) target = $region44
      $region43: #{tpu_custom_call.1} parent=5 // pred_region
        // Predicated region
        $region45: #{tpu_custom_call.1} parent=43 // pred_check
          %p348 = pneg %p47
        $region46: #{tpu_custom_call.1} parent=43 // pred_check_branch
          %350 = sbr.rel (%p348) target = $region48
        $region47: #{tpu_custom_call.1} parent=43 // pred_region
          %s351 = sand.u32 %s37, 1
          %s352 = scalar_lea.sflag [#allocation3], %s351
          %s353 = sand.u32 %s37, 1
          %s354 = smul.addr %s353, 16
          %s355 = scalar_lea.vmem [#allocation2], %s354
          %s357 = ssub.s32 256, 256
          %358 = vsyncadd %s352, %s357
          %s359 = smul.addr %s27, 2
          %s360 = smul.addr %s359, 128
          %s361 = scalar_lea.hbm %s0, %s360
          %s362 = sshll.u32 %s355, 4
          %s363 = int_to_ptr.vmem [resolvable:$true] %s362
          %368 = dma.hbm_to_vmem [thread:$0]  %s361, 256, %s363, %s352, 128, 128, 8
        $region48: #{tpu_custom_call.1} parent=43 // pred_fallthru
          _
        // Predicated region
        $region49: #{tpu_custom_call.1} parent=43 // pred_check
          %p369 = pneg %p73
        $region50: #{tpu_custom_call.1} parent=43 // pred_check_branch
          %371 = sbr.rel (%p369) target = $region52
        $region51: #{tpu_custom_call.1} parent=43 // pred_region
          %s372 = sand.u32 %s27, 1
          %s373 = scalar_lea.sflag [#allocation6], %s372
          %s374 = sand.u32 %s63, 1
          %s375 = smul.addr %s374, 8
          %s376 = scalar_lea.vmem [#allocation5], %s375
          %s378 = ssub.s32 128, 128
          %379 = vsyncadd %s373, %s378
          %s380 = smul.addr %s27, 128
          %s381 = scalar_lea.hbm %s1, %s380
          %s383 = sshll.u32 %s376, 4
          %s384 = int_to_ptr.vmem [resolvable:$true] %s383
          %386 = dma.hbm_to_vmem [thread:$0]  %s381, 128, %s384, %s373
        $region52: #{tpu_custom_call.1} parent=43 // pred_fallthru
          _
        // Predicated region
        $region53: #{tpu_custom_call.1} parent=43 // pred_check
          %p387 = pneg %p99
        $region54: #{tpu_custom_call.1} parent=43 // pred_check_branch
          %389 = sbr.rel (%p387) target = $region56
        $region55: #{tpu_custom_call.1} parent=43 // pred_region
          %s390 = sand.u32 %s27, 1
          %s391 = scalar_lea.sflag [#allocation6], %s390
          %s392 = sand.u32 %s89, 1
          %s393 = smul.addr %s392, 8
          %s394 = scalar_lea.vmem [#allocation7], %s393
          %s396 = ssub.s32 128, 128
          %397 = vsyncadd %s391, %s396
          %s398 = smul.addr %s27, 128
          %s399 = scalar_lea.hbm %s2, %s398
          %s401 = sshll.u32 %s394, 4
          %s402 = int_to_ptr.vmem [resolvable:$true] %s401
          %404 = dma.hbm_to_vmem [thread:$0]  %s399, 128, %s402, %s391
        $region56: #{tpu_custom_call.1} parent=43 // pred_fallthru
          _
      $region44: #{tpu_custom_call.1} parent=5 // pred_fallthru
        _
      %p405 = scmp.le.s32.totalorder 1, %s27
      %p406 = scmp.lt.s32.totalorder %s27, 3
      %p407 = pnand %p405, %p406
      %p408 = pneg %p407
      // Predicated region
      $region57: #{tpu_custom_call.1} parent=5 // pred_check
        _
      $region58: #{tpu_custom_call.1} parent=5 // pred_check_branch
        %410 = sbr.rel (%p407) target = $region60
      $region59: #{tpu_custom_call.1} parent=5 // pred_region
        %s411 = ssub.s32 %s27, 1
        %s412 = sand.u32 %s40, 1
        %s413 = scalar_lea.sflag [#allocation3], %s412
        %s414 = sand.u32 %s40, 1
        %s415 = smul.addr %s414, 16
        %s416 = scalar_lea.vmem [#allocation2], %s415
        // Predicated region
        $region61: #{tpu_custom_call.1} parent=59 // pred_check
          %p417 = pneg %p53
        $region62: #{tpu_custom_call.1} parent=59 // pred_check_branch
          %419 = sbr.rel (%p417) target = $region64
        $region63: #{tpu_custom_call.1} parent=59 // pred_region
          %420 = dma.done %s413, 256
        $region64: #{tpu_custom_call.1} parent=59 // pred_fallthru
          _
        %s421 = sand.u32 %s32, 1
        %s422 = scalar_lea.sflag [#allocation6], %s421
        %s423 = sand.u32 %s66, 1
        %s424 = smul.addr %s423, 8
        %s425 = scalar_lea.vmem [#allocation5], %s424
        // Predicated region
        $region65: #{tpu_custom_call.1} parent=59 // pred_check
          %p426 = pneg %p79
        $region66: #{tpu_custom_call.1} parent=59 // pred_check_branch
          %428 = sbr.rel (%p426) target = $region68
        $region67: #{tpu_custom_call.1} parent=59 // pred_region
          %429 = dma.done %s422, 128
        $region68: #{tpu_custom_call.1} parent=59 // pred_fallthru
          _
        %s430 = sand.u32 %s32, 1
        %s431 = scalar_lea.sflag [#allocation6], %s430
        %s432 = sand.u32 %s92, 1
        %s433 = smul.addr %s432, 8
        %s434 = scalar_lea.vmem [#allocation7], %s433
        // Predicated region
        $region69: #{tpu_custom_call.1} parent=59 // pred_check
          %p435 = pneg %p105
        $region70: #{tpu_custom_call.1} parent=59 // pred_check_branch
          %437 = sbr.rel (%p435) target = $region72
        $region71: #{tpu_custom_call.1} parent=59 // pred_region
          %438 = dma.done %s431, 128
        $region72: #{tpu_custom_call.1} parent=59 // pred_fallthru
          _
        // Predicated region
        $region73: #{tpu_custom_call.1} parent=59 // pred_check
          %p439 = pneg %p126
        $region74: #{tpu_custom_call.1} parent=59 // pred_check_branch
          %441 = sbr.rel (%p439) target = $region76
        $region75: #{tpu_custom_call.1} parent=59 // pred_region
          %442 = dma.done [#allocation9], 512
        $region76: #{tpu_custom_call.1} parent=59 // pred_fallthru
          _
        // Predicated region
        $region77: #{tpu_custom_call.1} parent=59 // pred_check
          %p443 = pneg %p168
        $region78: #{tpu_custom_call.1} parent=59 // pred_check_branch
          %445 = sbr.rel (%p443) target = $region80
        $region79: #{tpu_custom_call.1} parent=59 // pred_region
          %446 = dma.done [#allocation9], 512
        $region80: #{tpu_custom_call.1} parent=59 // pred_fallthru
          _
        // Predicated region
        $region81: #{tpu_custom_call.1} parent=59 // pred_check
          %p447 = pneg %p210
        $region82: #{tpu_custom_call.1} parent=59 // pred_check_branch
          %449 = sbr.rel (%p447) target = $region84
        $region83: #{tpu_custom_call.1} parent=59 // pred_region
          %450 = dma.done [#allocation12], 512
        $region84: #{tpu_custom_call.1} parent=59 // pred_fallthru
          _
        %s451 = sand.u32 %s40, 1
        %s452 = scalar_lea.sflag [#allocation3], %s451
        %s453 = sand.u32 %s40, 1
        %s454 = smul.addr %s453, 16
        %s455 = scalar_lea.vmem [#allocation2], %s454
        %p456 = pneg %p53
        %p457 = pneg %p50
        %s458 = sand.u32 %s32, 1
        %s459 = scalar_lea.sflag [#allocation6], %s458
        %s460 = sand.u32 %s66, 1
        %s461 = smul.addr %s460, 8
        %s462 = scalar_lea.vmem [#allocation5], %s461
        %p463 = pneg %p79
        %p464 = pneg %p76
        %s465 = sand.u32 %s32, 1
        %s466 = scalar_lea.sflag [#allocation6], %s465
        %s467 = sand.u32 %s92, 1
        %s468 = smul.addr %s467, 8
        %s469 = scalar_lea.vmem [#allocation7], %s468
        %p470 = pneg %p105
        %p471 = pneg %p102
        %p472 = pneg %p126
        %p473 = pneg %p123
        %p474 = pneg %p147
        %p475 = pneg %p144
        %p476 = pneg %p168
        %p477 = pneg %p165
        %p478 = pneg %p189
        %p479 = pneg %p186
        %p480 = pneg %p210
        %p481 = pneg %p207
        %p482 = pneg %p231
        %p483 = pneg %p228
        %p484 = pneg %p252
        %p485 = pneg %p249
        %p486 = pneg %p278
        %p487 = pneg %p275
        %s488 = sand.u32 %s265, 1
        %s489 = scalar_lea.sflag [#allocation4], %s488
        %s490 = sand.u32 %s265, 1
        %s491 = smul.addr %s490, 16
        %s492 = scalar_lea.vmem [#allocation13], %s491
        %v493 = vld [vmem:[%s416] sm:$0xff]
        %v494 = vld [vmem:[%s416 + $0x8] sm:$0xff]
        %v495 = vld [vmem:[%s425] sm:$0xff]
        %v496 = vld [vmem:[%s434] sm:$0xff]
        %v497 = vld [vmem:[#allocation8] sm:$0xff]
        %v498 = vld [vmem:[#allocation8 + $0x8] sm:$0xff]
        %v499 = vld [vmem:[#allocation8 + $0x10] sm:$0xff]
        %v500 = vld [vmem:[#allocation8 + $0x18] sm:$0xff]
        %v501 = vld [vmem:[%s4] sm:$0x1]
        %v503 = vlaneseq
        %v504 = vshrl.u32 %v503, 7
        %v505 = vsub.s32 0, %v504
        %v506 = vrot.slane %v501, %v505
        %vm508 = vcmask 261120
        %v510 = vsel %vm508, %v493, 0
        %v513 = vsel %vm508, %v494, 0
        %515 = vmatprep.subr.mxu0 0.0
        %516 = vmatpush1.msra.mxu0 %v497
        %517 = vmatprep.subr.mxu0 0.0
        %518 = vmatpush1.msra.mxu0 %v498
        %519 = vmatprep.subr.mxu0 0.0
        %520 = vmatpush1.msra.mxu0 %v499
        %521 = vmatprep.subr.mxu0 0.0
        %522 = vmatpush1.msra.mxu0 %v500
        %523 = vmatprep.subr.mxu0 0.0
        %524 = vmatpush1.msra.mxu0 0.0
        %525 = vmatprep.subr.mxu0 0.0
        %526 = vmatpush1.msra.mxu0 0.0
        %527 = vmatprep.subr.mxu0 0.0
        %528 = vmatpush1.msra.mxu0 0.0
        %529 = vmatprep.subr.mxu0 0.0
        %530 = vmatpush1.msra.mxu0 0.0
        %531 = vmatprep.subr.mxu0 0.0
        %532 = vmatpush1.msra.mxu0 0.0
        %533 = vmatprep.subr.mxu0 0.0
        %534 = vmatpush1.msra.mxu0 0.0
        %535 = vmatprep.subr.mxu0 0.0
        %536 = vmatpush1.msra.mxu0 0.0
        %537 = vmatprep.subr.mxu0 0.0
        %538 = vmatpush1.msra.mxu0 0.0
        %539 = vmatprep.subr.mxu0 0.0
        %540 = vmatpush1.msra.mxu0 0.0
        %541 = vmatprep.subr.mxu0 0.0
        %542 = vmatpush1.msra.mxu0 0.0
        %543 = vmatprep.subr.mxu0 0.0
        %544 = vmatpush1.msra.mxu0 0.0
        %545 = vmatprep.subr.mxu0 0.0
        %546 = vmatpush1.msra.mxu0 0.0
        %547 = vmatprep.subr.mxu0 0.0
        %548 = vmatpush1.msra.mxu0 0.0
        %549 = vmatprep.subr.mxu0 0.0
        %550 = vmatpush1.msra.mxu0 0.0
        %551 = vmatprep.subr.mxu0 0.0
        %552 = vmatpush1.msra.mxu0 0.0
        %553 = vmatprep.subr.mxu0 0.0
        %554 = vmatpush1.msra.mxu0 0.0
        %555 = vmatprep.subr.mxu0 0.0
        %556 = vmatpush1.msra.mxu0 0.0
        %557 = vmatprep.subr.mxu0 0.0
        %558 = vmatpush1.msra.mxu0 0.0
        %559 = vmatprep.subr.mxu0 0.0
        %560 = vmatpush1.msra.mxu0 0.0
        %561 = vmatprep.subr.mxu0 0.0
        %562 = vmatpush1.msra.mxu0 0.0
        %563 = vmatprep.subr.mxu0 0.0
        %564 = vmatpush1.msra.mxu0 0.0
        %565 = vmatprep.subr.mxu0 0.0
        %566 = vmatpush1.msra.mxu0 0.0
        %567 = vmatprep.subr.mxu0 0.0
        %568 = vmatpush1.msra.mxu0 0.0
        %569 = vmatprep.subr.mxu0 0.0
        %570 = vmatpush1.msra.mxu0 0.0
        %571 = vmatprep.subr.mxu0 0.0
        %572 = vmatpush1.msra.mxu0 0.0
        %573 = vmatprep.subr.mxu0 0.0
        %574 = vmatpush1.msra.mxu0 0.0
        %575 = vmatprep.subr.mxu0 0.0
        %576 = vmatpush1.msra.mxu0 0.0
        %577 = vmatprep.subr.mxu0 0.0
        %578 = vmatpush1.msra.mxu0 0.0
        %579 = vmatprep.mubr.f32.mxu0 0.0
        %580 = vmatmul.mubr.f32.gmra.mrb[0].mxu0 %v510
        %v581 = vpop.f32.mrb[0].mxu0
        %v582 = vadd.f32 %v506, %v581
        %v583 = vpop.f32.mrb[0].mxu0
        %584 = vmatprep.mubr.f32.mxu0 0.0
        %585 = vmatmul.mubr.f32.gmra.mrb[0].mxu0 %v513
        %v586 = vpop.f32.mrb[0].mxu0
        %v587 = vadd.f32 %v506, %v586
        %v588 = vpop.f32.mrb[0].mxu0
        %589 = vdwg.mxu0
        %v590 = vld [vmem:[#allocation10] sm:$0xff]
        %v591 = vld [vmem:[#allocation10 + $0x8] sm:$0xff]
        %v592 = vld [vmem:[#allocation10 + $0x10] sm:$0xff]
        %v593 = vld [vmem:[#allocation10 + $0x18] sm:$0xff]
        %v594 = vld [vmem:[%s6] sm:$0x1]
        %v596 = vlaneseq
        %v597 = vshrl.u32 %v596, 7
        %v598 = vsub.s32 0, %v597
        %v599 = vrot.slane %v594, %v598
        %v602 = vsel %vm508, %v495, 0
        %604 = vmatprep.subr.mxu0 0.0
        %605 = vmatpush1.msra.mxu0 %v590
        %606 = vmatprep.subr.mxu0 0.0
        %607 = vmatpush1.msra.mxu0 %v591
        %608 = vmatprep.subr.mxu0 0.0
        %609 = vmatpush1.msra.mxu0 %v592
        %610 = vmatprep.subr.mxu0 0.0
        %611 = vmatpush1.msra.mxu0 %v593
        %612 = vmatprep.subr.mxu0 0.0
        %613 = vmatpush1.msra.mxu0 0.0
        %614 = vmatprep.subr.mxu0 0.0
        %615 = vmatpush1.msra.mxu0 0.0
        %616 = vmatprep.subr.mxu0 0.0
        %617 = vmatpush1.msra.mxu0 0.0
        %618 = vmatprep.subr.mxu0 0.0
        %619 = vmatpush1.msra.mxu0 0.0
        %620 = vmatprep.subr.mxu0 0.0
        %621 = vmatpush1.msra.mxu0 0.0
        %622 = vmatprep.subr.mxu0 0.0
        %623 = vmatpush1.msra.mxu0 0.0
        %624 = vmatprep.subr.mxu0 0.0
        %625 = vmatpush1.msra.mxu0 0.0
        %626 = vmatprep.subr.mxu0 0.0
        %627 = vmatpush1.msra.mxu0 0.0
        %628 = vmatprep.subr.mxu0 0.0
        %629 = vmatpush1.msra.mxu0 0.0
        %630 = vmatprep.subr.mxu0 0.0
        %631 = vmatpush1.msra.mxu0 0.0
        %632 = vmatprep.subr.mxu0 0.0
        %633 = vmatpush1.msra.mxu0 0.0
        %634 = vmatprep.subr.mxu0 0.0
        %635 = vmatpush1.msra.mxu0 0.0
        %636 = vmatprep.subr.mxu0 0.0
        %637 = vmatpush1.msra.mxu0 0.0
        %638 = vmatprep.subr.mxu0 0.0
        %639 = vmatpush1.msra.mxu0 0.0
        %640 = vmatprep.subr.mxu0 0.0
        %641 = vmatpush1.msra.mxu0 0.0
        %642 = vmatprep.subr.mxu0 0.0
        %643 = vmatpush1.msra.mxu0 0.0
        %644 = vmatprep.subr.mxu0 0.0
        %645 = vmatpush1.msra.mxu0 0.0
        %646 = vmatprep.subr.mxu0 0.0
        %647 = vmatpush1.msra.mxu0 0.0
        %648 = vmatprep.subr.mxu0 0.0
        %649 = vmatpush1.msra.mxu0 0.0
        %650 = vmatprep.subr.mxu0 0.0
        %651 = vmatpush1.msra.mxu0 0.0
        %652 = vmatprep.subr.mxu0 0.0
        %653 = vmatpush1.msra.mxu0 0.0
        %654 = vmatprep.subr.mxu0 0.0
        %655 = vmatpush1.msra.mxu0 0.0
        %656 = vmatprep.subr.mxu0 0.0
        %657 = vmatpush1.msra.mxu0 0.0
        %658 = vmatprep.subr.mxu0 0.0
        %659 = vmatpush1.msra.mxu0 0.0
        %660 = vmatprep.subr.mxu0 0.0
        %661 = vmatpush1.msra.mxu0 0.0
        %662 = vmatprep.subr.mxu0 0.0
        %663 = vmatpush1.msra.mxu0 0.0
        %664 = vmatprep.subr.mxu0 0.0
        %665 = vmatpush1.msra.mxu0 0.0
        %666 = vmatprep.subr.mxu0 0.0
        %667 = vmatpush1.msra.mxu0 0.0
        %668 = vmatprep.mubr.f32.mxu0 0.0
        %669 = vmatmul.mubr.f32.gmra.mrb[0].mxu0 %v602
        %v670 = vpop.f32.mrb[0].mxu0
        %v671 = vadd.f32 %v599, %v670
        %v672 = vpop.f32.mrb[0].mxu0
        %673 = vdwg.mxu0
        %v674 = vld [vmem:[#allocation11] sm:$0xff]
        %v675 = vld [vmem:[#allocation11 + $0x8] sm:$0xff]
        %v676 = vld [vmem:[#allocation11 + $0x10] sm:$0xff]
        %v677 = vld [vmem:[#allocation11 + $0x18] sm:$0xff]
        %v678 = vld [vmem:[%s8] sm:$0x1]
        %v680 = vlaneseq
        %v681 = vshrl.u32 %v680, 7
        %v682 = vsub.s32 0, %v681
        %v683 = vrot.slane %v678, %v682
        %v686 = vsel %vm508, %v496, 0
        %688 = vmatprep.subr.mxu0 0.0
        %689 = vmatpush1.msra.mxu0 %v674
        %690 = vmatprep.subr.mxu0 0.0
        %691 = vmatpush1.msra.mxu0 %v675
        %692 = vmatprep.subr.mxu0 0.0
        %693 = vmatpush1.msra.mxu0 %v676
        %694 = vmatprep.subr.mxu0 0.0
        %695 = vmatpush1.msra.mxu0 %v677
        %696 = vmatprep.subr.mxu0 0.0
        %697 = vmatpush1.msra.mxu0 0.0
        %698 = vmatprep.subr.mxu0 0.0
        %699 = vmatpush1.msra.mxu0 0.0
        %700 = vmatprep.subr.mxu0 0.0
        %701 = vmatpush1.msra.mxu0 0.0
        %702 = vmatprep.subr.mxu0 0.0
        %703 = vmatpush1.msra.mxu0 0.0
        %704 = vmatprep.subr.mxu0 0.0
        %705 = vmatpush1.msra.mxu0 0.0
        %706 = vmatprep.subr.mxu0 0.0
        %707 = vmatpush1.msra.mxu0 0.0
        %708 = vmatprep.subr.mxu0 0.0
        %709 = vmatpush1.msra.mxu0 0.0
        %710 = vmatprep.subr.mxu0 0.0
        %711 = vmatpush1.msra.mxu0 0.0
        %712 = vmatprep.subr.mxu0 0.0
        %713 = vmatpush1.msra.mxu0 0.0
        %714 = vmatprep.subr.mxu0 0.0
        %715 = vmatpush1.msra.mxu0 0.0
        %716 = vmatprep.subr.mxu0 0.0
        %717 = vmatpush1.msra.mxu0 0.0
        %718 = vmatprep.subr.mxu0 0.0
        %719 = vmatpush1.msra.mxu0 0.0
        %720 = vmatprep.subr.mxu0 0.0
        %721 = vmatpush1.msra.mxu0 0.0
        %722 = vmatprep.subr.mxu0 0.0
        %723 = vmatpush1.msra.mxu0 0.0
        %724 = vmatprep.subr.mxu0 0.0
        %725 = vmatpush1.msra.mxu0 0.0
        %726 = vmatprep.subr.mxu0 0.0
        %727 = vmatpush1.msra.mxu0 0.0
        %728 = vmatprep.subr.mxu0 0.0
        %729 = vmatpush1.msra.mxu0 0.0
        %730 = vmatprep.subr.mxu0 0.0
        %731 = vmatpush1.msra.mxu0 0.0
        %732 = vmatprep.subr.mxu0 0.0
        %733 = vmatpush1.msra.mxu0 0.0
        %734 = vmatprep.subr.mxu0 0.0
        %735 = vmatpush1.msra.mxu0 0.0
        %736 = vmatprep.subr.mxu0 0.0
        %737 = vmatpush1.msra.mxu0 0.0
        %738 = vmatprep.subr.mxu0 0.0
        %739 = vmatpush1.msra.mxu0 0.0
        %740 = vmatprep.subr.mxu0 0.0
        %741 = vmatpush1.msra.mxu0 0.0
        %742 = vmatprep.subr.mxu0 0.0
        %743 = vmatpush1.msra.mxu0 0.0
        %744 = vmatprep.subr.mxu0 0.0
        %745 = vmatpush1.msra.mxu0 0.0
        %746 = vmatprep.subr.mxu0 0.0
        %747 = vmatpush1.msra.mxu0 0.0
        %748 = vmatprep.subr.mxu0 0.0
        %749 = vmatpush1.msra.mxu0 0.0
        %750 = vmatprep.subr.mxu0 0.0
        %751 = vmatpush1.msra.mxu0 0.0
        %752 = vmatprep.mubr.f32.mxu0 0.0
        %753 = vmatmul.mubr.f32.gmra.mrb[0].mxu0 %v686
        %v754 = vpop.f32.mrb[0].mxu0
        %v755 = vadd.f32 %v683, %v754
        %v756 = vpop.f32.mrb[0].mxu0
        %757 = vdwg.mxu0
        %v759 = vsel %vm508, %v582, 0
        %v762 = vsel %vm508, %v587, 0
        %v765 = vsel %vm508, %v671, 0
        %v768 = vsel %vm508, %v755, 0
        %770 = vmatprep.subr.mxu0 0.0
        %771 = vmatpush1.xpose.msra.mxu0 %v765
        %772 = vmatprep.subr.mxu0 0.0
        %773 = vmatpush1.xpose.msra.mxu0 %v768
        %774 = vmatprep.subr.mxu0 0.0
        %775 = vmatpush1.xpose.msra.mxu0 0.0
        %776 = vmatprep.subr.mxu0 0.0
        %777 = vmatpush1.xpose.msra.mxu0 0.0
        %778 = vmatprep.subr.mxu0 0.0
        %779 = vmatpush1.xpose.msra.mxu0 0.0
        %780 = vmatprep.subr.mxu0 0.0
        %781 = vmatpush1.xpose.msra.mxu0 0.0
        %782 = vmatprep.subr.mxu0 0.0
        %783 = vmatpush1.xpose.msra.mxu0 0.0
        %784 = vmatprep.subr.mxu0 0.0
        %785 = vmatpush1.xpose.msra.mxu0 0.0
        %786 = vmatprep.subr.mxu0 0.0
        %787 = vmatpush1.xpose.msra.mxu0 0.0
        %788 = vmatprep.subr.mxu0 0.0
        %789 = vmatpush1.xpose.msra.mxu0 0.0
        %790 = vmatprep.subr.mxu0 0.0
        %791 = vmatpush1.xpose.msra.mxu0 0.0
        %792 = vmatprep.subr.mxu0 0.0
        %793 = vmatpush1.xpose.msra.mxu0 0.0
        %794 = vmatprep.subr.mxu0 0.0
        %795 = vmatpush1.xpose.msra.mxu0 0.0
        %796 = vmatprep.subr.mxu0 0.0
        %797 = vmatpush1.xpose.msra.mxu0 0.0
        %798 = vmatprep.subr.mxu0 0.0
        %799 = vmatpush1.xpose.msra.mxu0 0.0
        %800 = vmatprep.subr.mxu0 0.0
        %801 = vmatpush1.xpose.msra.mxu0 0.0
        %802 = vmatprep.subr.mxu0 0.0
        %803 = vmatpush1.xpose.msra.mxu0 0.0
        %804 = vmatprep.subr.mxu0 0.0
        %805 = vmatpush1.xpose.msra.mxu0 0.0
        %806 = vmatprep.subr.mxu0 0.0
        %807 = vmatpush1.xpose.msra.mxu0 0.0
        %808 = vmatprep.subr.mxu0 0.0
        %809 = vmatpush1.xpose.msra.mxu0 0.0
        %810 = vmatprep.subr.mxu0 0.0
        %811 = vmatpush1.xpose.msra.mxu0 0.0
        %812 = vmatprep.subr.mxu0 0.0
        %813 = vmatpush1.xpose.msra.mxu0 0.0
        %814 = vmatprep.subr.mxu0 0.0
        %815 = vmatpush1.xpose.msra.mxu0 0.0
        %816 = vmatprep.subr.mxu0 0.0
        %817 = vmatpush1.xpose.msra.mxu0 0.0
        %818 = vmatprep.subr.mxu0 0.0
        %819 = vmatpush1.xpose.msra.mxu0 0.0
        %820 = vmatprep.subr.mxu0 0.0
        %821 = vmatpush1.xpose.msra.mxu0 0.0
        %822 = vmatprep.subr.mxu0 0.0
        %823 = vmatpush1.xpose.msra.mxu0 0.0
        %824 = vmatprep.subr.mxu0 0.0
        %825 = vmatpush1.xpose.msra.mxu0 0.0
        %826 = vmatprep.subr.mxu0 0.0
        %827 = vmatpush1.xpose.msra.mxu0 0.0
        %828 = vmatprep.subr.mxu0 0.0
        %829 = vmatpush1.xpose.msra.mxu0 0.0
        %830 = vmatprep.subr.mxu0 0.0
        %831 = vmatpush1.xpose.msra.mxu0 0.0
        %832 = vmatprep.subr.mxu0 0.0
        %833 = vmatpush1.xpose.msra.mxu0 0.0
        %834 = vmatprep.mubr.f32.mxu0 0.0
        %835 = vmatmul.mubr.f32.gmra.mrb[0].mxu0 %v759
        %v836 = vpop.f32.mrb[0].mxu0
        %v837 = vadd.f32 0.0, %v836
        %v838 = vpop.f32.mrb[0].mxu0
        %839 = vmatprep.mubr.f32.mxu0 0.0
        %840 = vmatmul.mubr.f32.gmra.mrb[0].mxu0 %v762
        %v841 = vpop.f32.mrb[0].mxu0
        %v842 = vadd.f32 0.0, %v841
        %v843 = vpop.f32.mrb[0].mxu0
        %844 = vdwg.mxu0
        %v845 = vmul.f32 %v837, 0.17677669
        %v846 = vmul.f32 %v842, 0.17677669
        %vm847 = vcmask 64512
        %v848 = vsel %vm847, %v845, -inf
        %849 = vmax.xlane.f32.xlu0 %v848
        %v850 = vpop.xlane.xlu0 %849
        %v851 = vsel %vm847, %v846, -inf
        %852 = vmax.xlane.f32.xlu0 %v851
        %v853 = vpop.xlane.xlu0 %852
        %v854 = vsub.f32 %v845, %v850
        %v855 = vsub.f32 %v846, %v853
        %v856 = vmul.f32 %v854, 1.442695
        %v857 = vpow.pop %v856
        %v858 = vmul.f32 %v855, 1.442695
        %v859 = vpow.pop %v858
        %v860 = vsel %vm847, %v857, 0.0
        %861 = vadd.xlane.f32.xlu0 %v860
        %v862 = vpop.xlane.xlu0 %861
        %v863 = vsel %vm847, %v859, 0.0
        %864 = vadd.xlane.f32.xlu0 %v863
        %v865 = vpop.xlane.xlu0 %864
        %v866 = vrcp.pop %v862
        %v867 = vrcp.pop %v865
        %v868 = vmul.f32 %v857, %v866
        %v869 = vmul.f32 %v859, %v867
        %vm870 = vcmask 130112
        %v871 = vsel %vm870, %v845, -inf
        %872 = vmax.xlane.f32.xlu0 %v871
        %v873 = vpop.xlane.xlu0 %872
        %v874 = vsel %vm870, %v846, -inf
        %875 = vmax.xlane.f32.xlu0 %v874
        %v876 = vpop.xlane.xlu0 %875
        %v877 = vsub.f32 %v845, %v873
        %v878 = vsub.f32 %v846, %v876
        %v879 = vmul.f32 %v877, 1.442695
        %v880 = vpow.pop %v879
        %v881 = vmul.f32 %v878, 1.442695
        %v882 = vpow.pop %v881
        %885 = vrot.lane.b32.xlu0 %v880, 120
        %v886 = vpop.permute.xlu0 %885
        %887 = vrot.lane.b32.xlu0 %v882, 120
        %v888 = vpop.permute.xlu0 %887
        %v891 = vsel %vm847, %v886, 0.0
        %892 = vadd.xlane.f32.xlu0 %v891
        %v893 = vpop.xlane.xlu0 %892
        %v894 = vsel %vm847, %v888, 0.0
        %895 = vadd.xlane.f32.xlu0 %v894
        %v896 = vpop.xlane.xlu0 %895
        %v897 = vrcp.pop %v893
        %v898 = vrcp.pop %v896
        %v899 = vmul.f32 %v880, %v897
        %v900 = vmul.f32 %v882, %v898
        %901 = vrot.lane.b32.xlu0 %v671, 96
        %v902 = vpop.permute.xlu0 %901
        %v905 = vsel %vm847, %v868, 0
        %v908 = vsel %vm847, %v869, 0
        %910 = vmatprep.subr.mxu0 0.0
        %911 = vmatpush1.msra.mxu0 %v902
        %912 = vmatprep.subr.mxu0 0.0
        %913 = vmatpush1.msra.mxu0 0.0
        %914 = vmatprep.subr.mxu0 0.0
        %915 = vmatpush1.msra.mxu0 0.0
        %916 = vmatprep.subr.mxu0 0.0
        %917 = vmatpush1.msra.mxu0 0.0
        %918 = vmatprep.subr.mxu0 0.0
        %919 = vmatpush1.msra.mxu0 0.0
        %920 = vmatprep.subr.mxu0 0.0
        %921 = vmatpush1.msra.mxu0 0.0
        %922 = vmatprep.subr.mxu0 0.0
        %923 = vmatpush1.msra.mxu0 0.0
        %924 = vmatprep.subr.mxu0 0.0
        %925 = vmatpush1.msra.mxu0 0.0
        %926 = vmatprep.subr.mxu0 0.0
        %927 = vmatpush1.msra.mxu0 0.0
        %928 = vmatprep.subr.mxu0 0.0
        %929 = vmatpush1.msra.mxu0 0.0
        %930 = vmatprep.subr.mxu0 0.0
        %931 = vmatpush1.msra.mxu0 0.0
        %932 = vmatprep.subr.mxu0 0.0
        %933 = vmatpush1.msra.mxu0 0.0
        %934 = vmatprep.subr.mxu0 0.0
        %935 = vmatpush1.msra.mxu0 0.0
        %936 = vmatprep.subr.mxu0 0.0
        %937 = vmatpush1.msra.mxu0 0.0
        %938 = vmatprep.subr.mxu0 0.0
        %939 = vmatpush1.msra.mxu0 0.0
        %940 = vmatprep.subr.mxu0 0.0
        %941 = vmatpush1.msra.mxu0 0.0
        %942 = vmatprep.subr.mxu0 0.0
        %943 = vmatpush1.msra.mxu0 0.0
        %944 = vmatprep.subr.mxu0 0.0
        %945 = vmatpush1.msra.mxu0 0.0
        %946 = vmatprep.subr.mxu0 0.0
        %947 = vmatpush1.msra.mxu0 0.0
        %948 = vmatprep.subr.mxu0 0.0
        %949 = vmatpush1.msra.mxu0 0.0
        %950 = vmatprep.subr.mxu0 0.0
        %951 = vmatpush1.msra.mxu0 0.0
        %952 = vmatprep.subr.mxu0 0.0
        %953 = vmatpush1.msra.mxu0 0.0
        %954 = vmatprep.subr.mxu0 0.0
        %955 = vmatpush1.msra.mxu0 0.0
        %956 = vmatprep.subr.mxu0 0.0
        %957 = vmatpush1.msra.mxu0 0.0
        %958 = vmatprep.subr.mxu0 0.0
        %959 = vmatpush1.msra.mxu0 0.0
        %960 = vmatprep.subr.mxu0 0.0
        %961 = vmatpush1.msra.mxu0 0.0
        %962 = vmatprep.subr.mxu0 0.0
        %963 = vmatpush1.msra.mxu0 0.0
        %964 = vmatprep.subr.mxu0 0.0
        %965 = vmatpush1.msra.mxu0 0.0
        %966 = vmatprep.subr.mxu0 0.0
        %967 = vmatpush1.msra.mxu0 0.0
        %968 = vmatprep.subr.mxu0 0.0
        %969 = vmatpush1.msra.mxu0 0.0
        %970 = vmatprep.subr.mxu0 0.0
        %971 = vmatpush1.msra.mxu0 0.0
        %972 = vmatprep.subr.mxu0 0.0
        %973 = vmatpush1.msra.mxu0 0.0
        %974 = vmatprep.mubr.f32.mxu0 0.0
        %975 = vmatmul.mubr.f32.gmra.mrb[0].mxu0 %v905
        %v976 = vpop.f32.mrb[0].mxu0
        %v977 = vadd.f32 0.0, %v976
        %v978 = vpop.f32.mrb[0].mxu0
        %979 = vmatprep.mubr.f32.mxu0 0.0
        %980 = vmatmul.mubr.f32.gmra.mrb[0].mxu0 %v908
        %v981 = vpop.f32.mrb[0].mxu0
        %v982 = vadd.f32 0.0, %v981
        %v983 = vpop.f32.mrb[0].mxu0
        %984 = vdwg.mxu0
        %987 = vrot.lane.b32.xlu0 %v899, 120
        %v988 = vpop.permute.xlu0 %987
        %989 = vrot.lane.b32.xlu0 %v900, 120
        %v990 = vpop.permute.xlu0 %989
        %991 = vrot.lane.b32.xlu0 %v755, 96
        %v992 = vpop.permute.xlu0 %991
        %v994 = vsel %vm847, %v988, 0
        %v996 = vsel %vm847, %v990, 0
        %998 = vmatprep.subr.mxu0 0.0
        %999 = vmatpush1.msra.mxu0 %v992
        %1000 = vmatprep.subr.mxu0 0.0
        %1001 = vmatpush1.msra.mxu0 0.0
        %1002 = vmatprep.subr.mxu0 0.0
        %1003 = vmatpush1.msra.mxu0 0.0
        %1004 = vmatprep.subr.mxu0 0.0
        %1005 = vmatpush1.msra.mxu0 0.0
        %1006 = vmatprep.subr.mxu0 0.0
        %1007 = vmatpush1.msra.mxu0 0.0
        %1008 = vmatprep.subr.mxu0 0.0
        %1009 = vmatpush1.msra.mxu0 0.0
        %1010 = vmatprep.subr.mxu0 0.0
        %1011 = vmatpush1.msra.mxu0 0.0
        %1012 = vmatprep.subr.mxu0 0.0
        %1013 = vmatpush1.msra.mxu0 0.0
        %1014 = vmatprep.subr.mxu0 0.0
        %1015 = vmatpush1.msra.mxu0 0.0
        %1016 = vmatprep.subr.mxu0 0.0
        %1017 = vmatpush1.msra.mxu0 0.0
        %1018 = vmatprep.subr.mxu0 0.0
        %1019 = vmatpush1.msra.mxu0 0.0
        %1020 = vmatprep.subr.mxu0 0.0
        %1021 = vmatpush1.msra.mxu0 0.0
        %1022 = vmatprep.subr.mxu0 0.0
        %1023 = vmatpush1.msra.mxu0 0.0
        %1024 = vmatprep.subr.mxu0 0.0
        %1025 = vmatpush1.msra.mxu0 0.0
        %1026 = vmatprep.subr.mxu0 0.0
        %1027 = vmatpush1.msra.mxu0 0.0
        %1028 = vmatprep.subr.mxu0 0.0
        %1029 = vmatpush1.msra.mxu0 0.0
        %1030 = vmatprep.subr.mxu0 0.0
        %1031 = vmatpush1.msra.mxu0 0.0
        %1032 = vmatprep.subr.mxu0 0.0
        %1033 = vmatpush1.msra.mxu0 0.0
        %1034 = vmatprep.subr.mxu0 0.0
        %1035 = vmatpush1.msra.mxu0 0.0
        %1036 = vmatprep.subr.mxu0 0.0
        %1037 = vmatpush1.msra.mxu0 0.0
        %1038 = vmatprep.subr.mxu0 0.0
        %1039 = vmatpush1.msra.mxu0 0.0
        %1040 = vmatprep.subr.mxu0 0.0
        %1041 = vmatpush1.msra.mxu0 0.0
        %1042 = vmatprep.subr.mxu0 0.0
        %1043 = vmatpush1.msra.mxu0 0.0
        %1044 = vmatprep.subr.mxu0 0.0
        %1045 = vmatpush1.msra.mxu0 0.0
        %1046 = vmatprep.subr.mxu0 0.0
        %1047 = vmatpush1.msra.mxu0 0.0
        %1048 = vmatprep.subr.mxu0 0.0
        %1049 = vmatpush1.msra.mxu0 0.0
        %1050 = vmatprep.subr.mxu0 0.0
        %1051 = vmatpush1.msra.mxu0 0.0
        %1052 = vmatprep.subr.mxu0 0.0
        %1053 = vmatpush1.msra.mxu0 0.0
        %1054 = vmatprep.subr.mxu0 0.0
        %1055 = vmatpush1.msra.mxu0 0.0
        %1056 = vmatprep.subr.mxu0 0.0
        %1057 = vmatpush1.msra.mxu0 0.0
        %1058 = vmatprep.subr.mxu0 0.0
        %1059 = vmatpush1.msra.mxu0 0.0
        %1060 = vmatprep.subr.mxu0 0.0
        %1061 = vmatpush1.msra.mxu0 0.0
        %1062 = vmatprep.mubr.f32.mxu0 0.0
        %1063 = vmatmul.mubr.f32.gmra.mrb[0].mxu0 %v994
        %v1064 = vpop.f32.mrb[0].mxu0
        %v1065 = vadd.f32 0.0, %v1064
        %v1066 = vpop.f32.mrb[0].mxu0
        %1067 = vmatprep.mubr.f32.mxu0 0.0
        %1068 = vmatmul.mubr.f32.gmra.mrb[0].mxu0 %v996
        %v1069 = vpop.f32.mrb[0].mxu0
        %v1070 = vadd.f32 0.0, %v1069
        %v1071 = vpop.f32.mrb[0].mxu0
        %1072 = vdwg.mxu0
        %v1073 = vld [vmem:[%s9] sm:$0x1]
        %v1074 = vld [vmem:[%s9 + $0x1] sm:$0x1]
        %v1075 = vadd.f32 %v493, %v977
        %v1076 = vadd.f32 %v494, %v982
        %v1077 = vsel %vm508, %v1075, 0.0
        %1078 = vadd.xlane.f32.xlu0 %v1077
        %v1079 = vpop.xlane.xlu0 %1078
        %v1080 = vsel %vm508, %v1076, 0.0
        %1081 = vadd.xlane.f32.xlu0 %v1080
        %v1082 = vpop.xlane.xlu0 %1081
        %v1083 = vrcp.pop 32.0
        %v1084 = vmul.f32 %v1079, %v1083
        %v1085 = vmul.f32 %v1082, %v1083
        %v1086 = vsub.f32 %v1075, %v1084
        %v1087 = vsub.f32 %v1076, %v1085
        %v1088 = vmul.f32 %v1086, %v1086
        %v1089 = vmul.f32 %v1087, %v1087
        %v1090 = vsel %vm508, %v1088, 0.0
        %1091 = vadd.xlane.f32.xlu0 %v1090
        %v1092 = vpop.xlane.xlu0 %1091
        %v1093 = vsel %vm508, %v1089, 0.0
        %1094 = vadd.xlane.f32.xlu0 %v1093
        %v1095 = vpop.xlane.xlu0 %1094
        %v1096 = vmul.f32 %v1092, %v1083
        %v1097 = vmul.f32 %v1095, %v1083
        %v1098 = vadd.f32 %v1096, 1e-05
        %v1099 = vadd.f32 %v1097, 1e-05
        %v1100 = vrsqrt.pop %v1098
        %v1101 = vrsqrt.pop %v1099
        %v1102 = vmul.f32 %v1086, %v1100
        %v1103 = vmul.f32 %v1087, %v1101
        %v1104 = vlaneseq
        %v1105 = vshrl.u32 %v1104, 7
        %v1106 = vsub.s32 0, %v1105
        %v1107 = vrot.slane %v1073, %v1106
        %v1108 = vmul.f32 %v1102, %v1107
        %v1109 = vmul.f32 %v1103, %v1107
        %v1110 = vlaneseq
        %v1111 = vshrl.u32 %v1110, 7
        %v1112 = vsub.s32 0, %v1111
        %v1113 = vrot.slane %v1074, %v1112
        %v1114 = vadd.f32 %v1108, %v1113
        %v1115 = vadd.f32 %v1109, %v1113
        %v1116 = vadd.f32 %v493, %v1065
        %v1117 = vadd.f32 %v494, %v1070
        %v1118 = vsel %vm508, %v1116, 0.0
        %1119 = vadd.xlane.f32.xlu0 %v1118
        %v1120 = vpop.xlane.xlu0 %1119
        %v1121 = vsel %vm508, %v1117, 0.0
        %1122 = vadd.xlane.f32.xlu0 %v1121
        %v1123 = vpop.xlane.xlu0 %1122
        %v1124 = vmul.f32 %v1120, %v1083
        %v1125 = vmul.f32 %v1123, %v1083
        %v1126 = vsub.f32 %v1116, %v1124
        %v1127 = vsub.f32 %v1117, %v1125
        %v1128 = vmul.f32 %v1126, %v1126
        %v1129 = vmul.f32 %v1127, %v1127
        %v1130 = vsel %vm508, %v1128, 0.0
        %1131 = vadd.xlane.f32.xlu0 %v1130
        %v1132 = vpop.xlane.xlu0 %1131
        %v1133 = vsel %vm508, %v1129, 0.0
        %1134 = vadd.xlane.f32.xlu0 %v1133
        %v1135 = vpop.xlane.xlu0 %1134
        %v1136 = vmul.f32 %v1132, %v1083
        %v1137 = vmul.f32 %v1135, %v1083
        %v1138 = vadd.f32 %v1136, 1e-05
        %v1139 = vadd.f32 %v1137, 1e-05
        %v1140 = vrsqrt.pop %v1138
        %v1141 = vrsqrt.pop %v1139
        %v1142 = vmul.f32 %v1126, %v1140
        %v1143 = vmul.f32 %v1127, %v1141
        %v1144 = vmul.f32 %v1142, %v1107
        %v1145 = vmul.f32 %v1143, %v1107
        %v1146 = vadd.f32 %v1144, %v1113
        %v1147 = vadd.f32 %v1145, %v1113
        %1150 = vrot.lane.b32.xlu0 %v1146, 32
        %v1151 = vpop.permute.xlu0 %1150
        %1152 = vrot.lane.b32.xlu0 %v1147, 32
        %v1153 = vpop.permute.xlu0 %1152
        %v1156 = vsel %vm508, %v1114, %v1151
        %v1157 = vsel %vm508, %v1115, %v1153
        %vm1158 = vcmask 523264
        %1159 = vst.msk [vmem:[%s492] sm:$0xff] %vm1158, %v1156
        %1160 = vst.msk [vmem:[%s492 + $0x8] sm:$0xff] %vm1158, %v1157
        %s1161 = sand.u32 %s265, 1
        %s1162 = scalar_lea.sflag [#allocation4], %s1161
        %s1163 = sand.u32 %s265, 1
        %s1164 = smul.addr %s1163, 16
        %s1165 = scalar_lea.vmem [#allocation13], %s1164
        // Predicated region
        $region85: #{tpu_custom_call.1} parent=59 // pred_check
          %p1166 = pneg %p275
        $region86: #{tpu_custom_call.1} parent=59 // pred_check_branch
          %1168 = sbr.rel (%p1166) target = $region88
        $region87: #{tpu_custom_call.1} parent=59 // pred_region
          %s1170 = ssub.s32 256, 256
          %1171 = vsyncadd %s1162, %s1170
          %s1172 = smul.addr %s32, 2
          %s1173 = smul.addr %s1172, 128
          %s1174 = scalar_lea.hbm %s10, %s1173
          %s1175 = sshll.u32 %s1165, 4
          %s1176 = int_to_ptr.vmem [resolvable:$true] %s1175
          %1181 = dma.vmem_to_hbm [thread:$0]  %s1176, 256, %s1174, %s1162, 128, 128, 8
        $region88: #{tpu_custom_call.1} parent=59 // pred_fallthru
          _
      $region60: #{tpu_custom_call.1} parent=5 // pred_fallthru
        _
      %p1182 = scmp.le.s32.totalorder 2, %s27
      // Predicated region
      $region89: #{tpu_custom_call.1} parent=5 // pred_check
        %p1183 = pneg %p1182
      $region90: #{tpu_custom_call.1} parent=5 // pred_check_branch
        %1185 = sbr.rel (%p1183) target = $region92
      $region91: #{tpu_custom_call.1} parent=5 // pred_region
        %s1186 = ssub.s32 %s27, 2
        // Predicated region
        $region93: #{tpu_custom_call.1} parent=91 // pred_check
          %p1187 = pneg %p281
        $region94: #{tpu_custom_call.1} parent=91 // pred_check_branch
          %1189 = sbr.rel (%p1187) target = $region96
        $region95: #{tpu_custom_call.1} parent=91 // pred_region
          %s1190 = sand.u32 %s266, 1
          %s1191 = scalar_lea.sflag [#allocation4], %s1190
          %s1192 = sand.u32 %s266, 1
          %s1193 = smul.addr %s1192, 16
          %s1194 = scalar_lea.vmem [#allocation13], %s1193
          %1195 = dma.done %s1191, 256
        $region96: #{tpu_custom_call.1} parent=91 // pred_fallthru
          _
      $region92: #{tpu_custom_call.1} parent=5 // pred_fallthru
        _
    $region6: #{tpu_custom_call.1} parent=1 // loop_footer
      %s31 = sadd.s32 1, %s27
    $region7: #{tpu_custom_call.1} parent=1 // loop_footer_branch
      %26 = sbr.rel target = $region3
    $region8: #{tpu_custom_call.1} parent=1 // loop_exit
      _
    %1196 = vsyncpa [#allocation3], 1
    %s1197 = scalar_lea.sflag [#allocation3], 1
    %1198 = vsyncpa %s1197, 1
    %1199 = vsyncpa [#allocation6], 1
    %s1200 = scalar_lea.sflag [#allocation6], 1
    %1201 = vsyncpa %s1200, 1
    %1202 = vsyncpa [#allocation9], 1
    %1203 = vsyncpa [#allocation12], 1
    %1204 = vsyncpa [#allocation4], 1
    %s1205 = scalar_lea.sflag [#allocation4], 1
    %1206 = vsyncpa %s1205, 1

</llo_original>
